<compile_context>
chip_gen: v6e
topology: v6e:2x2x1
jax: 0.10.0
libtpu: 0.0.40
codegen_flags: <defaults>
</compile_context>

<pallas_src>
import jax
import jax.numpy as jnp
from jax import lax
from jax.experimental import pallas as pl
from jax.experimental.pallas import tpu as pltpu


# ----------------------------- Pallas kernel ------------------------------ #
def _bilstm_kernel(gx_ref, whh_ref, y_ref, hN_ref, cN_ref, h_sc, c_sc):
    """Fused bidirectional LSTM recurrence.

    Grid: (direction d in {0: fwd, 1: bwd}, time-block s).  Each grid step
    consumes TB precomputed input-gate tiles and runs TB recurrent updates.

    gx_ref : (TB, B, 4H) f32  precomputed x @ W_ih^T + b_ih + b_hh for this block
    whh_ref: (H, 4H)     bf16 W_hh^T for this direction
    y_ref  : (TB, B, H)       per-step hidden outputs for this (d, time-block)
    hN_ref : (B, H)           final hidden state for this direction
    cN_ref : (B, H)           final cell state for this direction
    h_sc/c_sc: (B, H) f32 VMEM recurrent state carried along the time axis
    """
    d = pl.program_id(0)
    s = pl.program_id(1)
    TB = y_ref.shape[0]
    H = h_sc.shape[-1]

    @pl.when(s == 0)
    def _():
        h_sc[...] = jnp.zeros_like(h_sc)
        c_sc[...] = jnp.zeros_like(c_sc)

    whh = whh_ref[...]

    def step(j, carry):
        h, c = carry
        # forward (d=0): jj = j ; backward (d=1): jj = TB-1-j (reverse time order)
        jj = j + d * (TB - 1 - 2 * j)
        gates = gx_ref[jj] + jnp.dot(h.astype(whh.dtype), whh,
                                     preferred_element_type=jnp.float32)
        # For production sizes keep H a multiple of 128 so these slices are
        # lane-aligned (test size H=32 is correct but uses sub-lane slices).
        i_g = jax.nn.sigmoid(gates[:, 0 * H:1 * H])
        f_g = jax.nn.sigmoid(gates[:, 1 * H:2 * H])
        g_g = jnp.tanh(gates[:, 2 * H:3 * H])
        o_g = jax.nn.sigmoid(gates[:, 3 * H:4 * H])
        c = f_g * c + i_g * g_g
        h = o_g * jnp.tanh(c)
        y_ref[jj] = h.astype(y_ref.dtype)
        return h, c

    h, c = lax.fori_loop(0, TB, step, (h_sc[...], c_sc[...]), unroll=True)
    h_sc[...] = h
    c_sc[...] = c

    @pl.when(s == pl.num_programs(1) - 1)
    def _():
        hN_ref[...] = h.astype(hN_ref.dtype)
        cN_ref[...] = c.astype(cN_ref.dtype)


def _bilstm_pallas(gx, whh_t, hidden_dim, time_block):
    """gx: (2, T2, B, 4H) f32, whh_t: (2, H, 4H) bf16 -> (y, h_n, c_n)."""
    _, T2, B, G = gx.shape
    H = hidden_dim
    TB = time_block
    NT = T2 // TB

    def t_blk(d, s):
        # forward (d=0): block s ; backward (d=1): block NT-1-s
        return s + d * (NT - 1 - 2 * s)

    return pl.pallas_call(
        _bilstm_kernel,
        out_shape=(
            jax.ShapeDtypeStruct((2, T2, B, H), jnp.float32),   # per-step hiddens
            jax.ShapeDtypeStruct((2, B, H), jnp.float32),       # h_n
            jax.ShapeDtypeStruct((2, B, H), jnp.float32),       # c_n
        ),
        grid_spec=pltpu.PrefetchScalarGridSpec(
            num_scalar_prefetch=0,
            grid=(2, NT),
            in_specs=[
                pl.BlockSpec((None, TB, B, G), lambda d, s: (d, t_blk(d, s), 0, 0)),
                pl.BlockSpec((None, H, G), lambda d, s: (d, 0, 0)),
            ],
            out_specs=[
                pl.BlockSpec((None, TB, B, H), lambda d, s: (d, t_blk(d, s), 0, 0)),
                pl.BlockSpec((None, B, H), lambda d, s: (d, 0, 0)),
                pl.BlockSpec((None, B, H), lambda d, s: (d, 0, 0)),
            ],
            scratch_shapes=[
                pltpu.VMEM((B, H), jnp.float32),
                pltpu.VMEM((B, H), jnp.float32),
            ],
        ),
        compiler_params=pltpu.CompilerParams(
            # direction axis independent -> parallel (2 TensorCores on v7x);
            # time axis carries the recurrence -> arbitrary.
            dimension_semantics=("parallel", "arbitrary"),
        ),
    )(gx, whh_t)


# ---------------------------- Module wrapper ------------------------------ #
class PyramidLSTMLayerPallas:
    """JAX/Pallas re-implementation of PyramidLSTMLayer (num_layers=1, bidirectional)."""

    def __init__(self, input_dim, hidden_dim, key, num_layers=1,
                 bidirectional=True, dropout=0.0):
        assert num_layers == 1, "only num_layers=1 implemented"
        assert bidirectional, "only bidirectional=True implemented"
        self.input_dim = input_dim
        self.hidden_dim = hidden_dim
        # TODO(synk): dropout is a no-op for num_layers=1 (matches PyTorch semantics).

        H, D2 = hidden_dim, input_dim * 2
        k = 1.0 / float(H) ** 0.5
        keys = jax.random.split(key, 8)

        def u(kk, shape):
            return jax.random.uniform(kk, shape, jnp.float32, -k, k)

        # PyTorch LSTM parameter shapes (gate order i, f, g, o).
        self.w_ih_f, self.w_hh_f = u(keys[0], (4 * H, D2)), u(keys[1], (4 * H, H))
        self.b_ih_f, self.b_hh_f = u(keys[2], (4 * H,)), u(keys[3], (4 * H,))
        self.w_ih_b, self.w_hh_b = u(keys[4], (4 * H, D2)), u(keys[5], (4 * H, H))
        self.b_ih_b, self.b_hh_b = u(keys[6], (4 * H,)), u(keys[7], (4 * H,))

        # Packed kernel-side parameters: bf16 weights (f32 accumulation in matmuls),
        # biases folded together once.
        self._wih_stack = jnp.stack([self.w_ih_f, self.w_ih_b], 0).astype(jnp.bfloat16)    # (2,4H,2D)
        self._whh_stack = jnp.transpose(
            jnp.stack([self.w_hh_f, self.w_hh_b], 0), (0, 2, 1)).astype(jnp.bfloat16)      # (2,H,4H)
        self._bias_stack = jnp.stack(
            [self.b_ih_f + self.b_hh_f, self.b_ih_b + self.b_hh_b], 0)                     # (2,4H)

    def __call__(self, inputs):
        B, maxlen, D = inputs.shape
        assert D == self.input_dim and maxlen % 2 == 0
        H = self.hidden_dim
        T2 = maxlen // 2

        # Pyramid reshape: halve time, double features (matches .view()).
        x = inputs.reshape(B, T2, 2 * D)
        # Single shared time-major rearrangement (used by both directions).
        x_tm = jnp.transpose(x, (1, 0, 2)).astype(jnp.bfloat16)        # (T2, B, 2D)

        # Hoisted input projection: one big MXU matmul (M = T2*B), bias folded in.
        gx = jnp.einsum('tbd,kgd->ktbg', x_tm, self._wih_stack,
                        preferred_element_type=jnp.float32)
        gx = gx + self._bias_stack[:, None, None, :]                   # (2,T2,B,4H) f32

        # Block several timesteps per grid step to amortize pipeline overhead.
        TB = next(c for c in (8, 4, 2, 1) if T2 % c == 0)

        y, h_n, c_n = _bilstm_pallas(gx, self._whh_stack, H, TB)

        # (2, T2, B, H) -> (B, T2, 2H); forward in [..., :H], backward in [..., H:].
        outputs = jnp.transpose(y, (2, 1, 0, 3)).reshape(B, T2, 2 * H)
        return outputs, (h_n, c_n)


# ------------------------- pure-JAX reference ----------------------------- #
def _lstm_ref_dir(x_bf, w_ih, w_hh, b_ih, b_hh, H, reverse):
    xs = x_bf[:, ::-1, :] if reverse else x_bf
    B = x_bf.shape[0]

    def step(carry, x_t):
        h, c = carry
        gates = x_t @ w_ih.T + h @ w_hh.T + b_ih + b_hh
        i, f, g, o = jnp.split(gates, 4, axis=-1)
        i, f, o = jax.nn.sigmoid(i), jax.nn.sigmoid(f), jax.nn.sigmoid(o)
        g = jnp.tanh(g)
        c = f * c + i * g
        h = o * jnp.tanh(c)
        return (h, c), h

    (hN, cN), outs = jax.lax.scan(
        step, (jnp.zeros((B, H), jnp.float32), jnp.zeros((B, H), jnp.float32)),
        jnp.swapaxes(xs, 0, 1))
    outs = jnp.swapaxes(outs, 0, 1)
    if reverse:
        outs = outs[:, ::-1, :]
    return outs, hN, cN


def _reference(layer, inputs):
    B, T, D = inputs.shape
    x = inputs.reshape(B, T // 2, 2 * D).astype(jnp.float32)
    H = layer.hidden_dim
    of, hf, cf = _lstm_ref_dir(x, layer.w_ih_f, layer.w_hh_f, layer.b_ih_f, layer.b_hh_f, H, False)
    ob, hb, cb = _lstm_ref_dir(x, layer.w_ih_b, layer.w_hh_b, layer.b_ih_b, layer.b_hh_b, H, True)
    return (jnp.concatenate([of, ob], axis=-1),
            (jnp.stack([hf, hb], 0), jnp.stack([cf, cb], 0)))


# --------------------------------- main ------------------------------------ #
if __name__ == "__main__":
    key = jax.random.PRNGKey(0)
    k_param, k_in = jax.random.split(key)

    batch_size, maxlen, input_dim, hidden_dim = 2, 32, 16, 32
    layer = PyramidLSTMLayerPallas(input_dim, hidden_dim, k_param)

    x = jax.random.normal(k_in, (batch_size, maxlen, input_dim), jnp.float32)

    outputs, (h_n, c_n) = layer(x)
    jax.block_until_ready((outputs, h_n, c_n))

    assert outputs.shape == (batch_size, maxlen // 2, 2 * hidden_dim)
    assert h_n.shape == (2, batch_size, hidden_dim)
    assert c_n.shape == (2, batch_size, hidden_dim)

    ref_out, (ref_h, ref_c) = _reference(layer, x)
    # bf16 matmul inputs (f32 accumulation, f32 h/c state) -> loosened tolerance.
    assert jnp.allclose(outputs, ref_out, atol=2e-2, rtol=2e-2)
    assert jnp.allclose(h_n, ref_h, atol=2e-2, rtol=2e-2)
    assert jnp.allclose(c_n, ref_c, atol=2e-2, rtol=2e-2)

    print("KERNEL_OK")
</pallas_src>

<mosaic_0001>
module attributes {stable_mosaic.version = 11 : i64} {
  func.func @_bilstm_kernel(%arg0: i32, %arg1: i32, %arg2: memref<1x8x2x128xf32, #tpu.memory_space<vmem>>, %arg3: memref<1x32x128xbf16, #tpu.memory_space<vmem>>, %arg4: memref<1x8x2x32xf32, #tpu.memory_space<vmem>>, %arg5: memref<1x2x32xf32, #tpu.memory_space<vmem>>, %arg6: memref<1x2x32xf32, #tpu.memory_space<vmem>>, %arg7: memref<2x32xf32, #tpu.memory_space<vmem>>, %arg8: memref<2x32xf32, #tpu.memory_space<vmem>>) attributes {dimension_semantics = [#tpu.dimension_semantics<parallel>, #tpu.dimension_semantics<arbitrary>], iteration_bounds = array<i64: 2, 2>, scalar_prefetch = 0 : i64, scratch_operands = 2 : i64, tpu.core_type = #tpu.core_type<tc>, window_params = [{transform_indices = @transform_0, window_bounds = array<i64: 1, 8, 2, 128>}, {transform_indices = @transform_1, window_bounds = array<i64: 1, 32, 128>}, {transform_indices = @transform_2, window_bounds = array<i64: 1, 8, 2, 32>}, {transform_indices = @transform_3, window_bounds = array<i64: 1, 2, 32>}, {transform_indices = @transform_4, window_bounds = array<i64: 1, 2, 32>}]} {
    %c0_i32 = arith.constant 0 : i32
    %0 = arith.cmpi eq, %arg1, %c0_i32 : i32
    %1 = arith.extui %0 : i1 to i32
    %c0_i32_0 = arith.constant 0 : i32
    %2 = arith.cmpi ne, %1, %c0_i32_0 : i32
    scf.if %2 {
      %cst_109 = arith.constant 0.000000e+00 : f32
      %324 = vector.broadcast %cst_109 : f32 to vector<2x32xf32>
      %c0_110 = arith.constant 0 : index
      %c0_111 = arith.constant 0 : index
      %325 = vector.load %arg7[%c0_110, %c0_111] : memref<2x32xf32, #tpu.memory_space<vmem>>, vector<2x32xf32>
      tpu.vector_store %arg7[%c0_110, %c0_111], %324 {strides = array<i32>} : memref<2x32xf32, #tpu.memory_space<vmem>>, vector<2x32xf32>,
      %cst_112 = arith.constant 0.000000e+00 : f32
      %326 = vector.broadcast %cst_112 : f32 to vector<2x32xf32>
      %c0_113 = arith.constant 0 : index
      %c0_114 = arith.constant 0 : index
      %327 = vector.load %arg8[%c0_113, %c0_114] : memref<2x32xf32, #tpu.memory_space<vmem>>, vector<2x32xf32>
      tpu.vector_store %arg8[%c0_113, %c0_114], %326 {strides = array<i32>} : memref<2x32xf32, #tpu.memory_space<vmem>>, vector<2x32xf32>,
    } else {
    }
    %c0 = arith.constant 0 : index
    %c0_1 = arith.constant 0 : index
    %c0_2 = arith.constant 0 : index
    %3 = vector.load %arg3[%c0, %c0_1, %c0_2] : memref<1x32x128xbf16, #tpu.memory_space<vmem>>, vector<1x32x128xbf16>
    %4 = vector.shape_cast %3 : vector<1x32x128xbf16> to vector<32x128xbf16>
    %c0_3 = arith.constant 0 : index
    %c0_4 = arith.constant 0 : index
    %5 = vector.load %arg7[%c0_3, %c0_4] : memref<2x32xf32, #tpu.memory_space<vmem>>, vector<2x32xf32>
    %c0_5 = arith.constant 0 : index
    %c0_6 = arith.constant 0 : index
    %6 = vector.load %arg8[%c0_5, %c0_6] : memref<2x32xf32, #tpu.memory_space<vmem>>, vector<2x32xf32>
    %c0_i32_7 = arith.constant 0 : i32
    %c2_i32 = arith.constant 2 : i32
    %7 = arith.muli %c2_i32, %c0_i32_7 : i32
    %c7_i32 = arith.constant 7 : i32
    %8 = arith.subi %c7_i32, %7 : i32
    %9 = arith.muli %arg0, %8 : i32
    %10 = arith.addi %c0_i32_7, %9 : i32
    %c0_8 = arith.constant 0 : index
    %11 = arith.index_cast %10 : i32 to index
    %c0_9 = arith.constant 0 : index
    %c0_10 = arith.constant 0 : index
    %12 = vector.load %arg2[%c0_8, %11, %c0_9, %c0_10] : memref<1x8x2x128xf32, #tpu.memory_space<vmem>>, vector<1x1x2x128xf32>
    %13 = vector.shape_cast %12 : vector<1x1x2x128xf32> to vector<2x128xf32>
    %14 = arith.truncf %5 : vector<2x32xf32> to vector<2x32xbf16>
    %cst = arith.constant dense<0.000000e+00> : vector<2x128xf32>
    %15 = tpu.matmul %14, %4, %cst {dimension_numbers = #tpu.dot_dimension_numbers<[1], [0], [0], [1], [0, 0, 1, 1], [], []>} : vector<2x32xbf16>, vector<32x128xbf16>, vector<2x128xf32> -> vector<2x128xf32>
    %16 = arith.addf %13, %15 : vector<2x128xf32>
    %17 = vector.extract_strided_slice %16 {offsets = [0, 0], sizes = [2, 32], strides = [1, 1]} : vector<2x128xf32> to vector<2x32xf32>
    %18 = arith.negf %17 : vector<2x32xf32>
    %19 = math.exp %18 : vector<2x32xf32>
    %cst_11 = arith.constant 1.000000e+00 : f32
    %20 = vector.broadcast %cst_11 : f32 to vector<2x32xf32>
    %21 = arith.addf %20, %19 : vector<2x32xf32>
    %22 = arith.divf %20, %21 : vector<2x32xf32>
    %23 = vector.extract_strided_slice %16 {offsets = [0, 32], sizes = [2, 32], strides = [1, 1]} : vector<2x128xf32> to vector<2x32xf32>
    %24 = arith.negf %23 : vector<2x32xf32>
    %25 = math.exp %24 : vector<2x32xf32>
    %cst_12 = arith.constant 1.000000e+00 : f32
    %26 = vector.broadcast %cst_12 : f32 to vector<2x32xf32>
    %27 = arith.addf %26, %25 : vector<2x32xf32>
    %28 = arith.divf %26, %27 : vector<2x32xf32>
    %29 = vector.extract_strided_slice %16 {offsets = [0, 64], sizes = [2, 32], strides = [1, 1]} : vector<2x128xf32> to vector<2x32xf32>
    %30 = math.tanh %29 : vector<2x32xf32>
    %31 = vector.extract_strided_slice %16 {offsets = [0, 96], sizes = [2, 32], strides = [1, 1]} : vector<2x128xf32> to vector<2x32xf32>
    %32 = arith.negf %31 : vector<2x32xf32>
    %33 = math.exp %32 : vector<2x32xf32>
    %cst_13 = arith.constant 1.000000e+00 : f32
    %34 = vector.broadcast %cst_13 : f32 to vector<2x32xf32>
    %35 = arith.addf %34, %33 : vector<2x32xf32>
    %36 = arith.divf %34, %35 : vector<2x32xf32>
    %37 = arith.mulf %28, %6 : vector<2x32xf32>
    %38 = arith.mulf %22, %30 : vector<2x32xf32>
    %39 = arith.addf %37, %38 : vector<2x32xf32>
    %40 = math.tanh %39 : vector<2x32xf32>
    %41 = arith.mulf %36, %40 : vector<2x32xf32>
    %c0_14 = arith.constant 0 : index
    %42 = arith.index_cast %10 : i32 to index
    %c0_15 = arith.constant 0 : index
    %c0_16 = arith.constant 0 : index
    %43 = vector.load %arg4[%c0_14, %42, %c0_15, %c0_16] : memref<1x8x2x32xf32, #tpu.memory_space<vmem>>, vector<1x1x2x32xf32>
    %44 = vector.shape_cast %43 : vector<1x1x2x32xf32> to vector<2x32xf32>
    %45 = vector.shape_cast %41 : vector<2x32xf32> to vector<1x1x2x32xf32>
    tpu.vector_store %arg4[%c0_14, %42, %c0_15, %c0_16], %45 {strides = array<i32>} : memref<1x8x2x32xf32, #tpu.memory_space<vmem>>, vector<1x1x2x32xf32>,
    %c1_i32 = arith.constant 1 : i32
    %c2_i32_17 = arith.constant 2 : i32
    %46 = arith.muli %c2_i32_17, %c1_i32 : i32
    %c7_i32_18 = arith.constant 7 : i32
    %47 = arith.subi %c7_i32_18, %46 : i32
    %48 = arith.muli %arg0, %47 : i32
    %49 = arith.addi %c1_i32, %48 : i32
    %c0_19 = arith.constant 0 : index
    %50 = arith.index_cast %49 : i32 to index
    %c0_20 = arith.constant 0 : index
    %c0_21 = arith.constant 0 : index
    %51 = vector.load %arg2[%c0_19, %50, %c0_20, %c0_21] : memref<1x8x2x128xf32, #tpu.memory_space<vmem>>, vector<1x1x2x128xf32>
    %52 = vector.shape_cast %51 : vector<1x1x2x128xf32> to vector<2x128xf32>
    %53 = arith.truncf %41 : vector<2x32xf32> to vector<2x32xbf16>
    %cst_22 = arith.constant dense<0.000000e+00> : vector<2x128xf32>
    %54 = tpu.matmul %53, %4, %cst_22 {dimension_numbers = #tpu.dot_dimension_numbers<[1], [0], [0], [1], [0, 0, 1, 1], [], []>} : vector<2x32xbf16>, vector<32x128xbf16>, vector<2x128xf32> -> vector<2x128xf32>
    %55 = arith.addf %52, %54 : vector<2x128xf32>
    %56 = vector.extract_strided_slice %55 {offsets = [0, 0], sizes = [2, 32], strides = [1, 1]} : vector<2x128xf32> to vector<2x32xf32>
    %57 = arith.negf %56 : vector<2x32xf32>
    %58 = math.exp %57 : vector<2x32xf32>
    %cst_23 = arith.constant 1.000000e+00 : f32
    %59 = vector.broadcast %cst_23 : f32 to vector<2x32xf32>
    %60 = arith.addf %59, %58 : vector<2x32xf32>
    %61 = arith.divf %59, %60 : vector<2x32xf32>
    %62 = vector.extract_strided_slice %55 {offsets = [0, 32], sizes = [2, 32], strides = [1, 1]} : vector<2x128xf32> to vector<2x32xf32>
    %63 = arith.negf %62 : vector<2x32xf32>
    %64 = math.exp %63 : vector<2x32xf32>
    %cst_24 = arith.constant 1.000000e+00 : f32
    %65 = vector.broadcast %cst_24 : f32 to vector<2x32xf32>
    %66 = arith.addf %65, %64 : vector<2x32xf32>
    %67 = arith.divf %65, %66 : vector<2x32xf32>
    %68 = vector.extract_strided_slice %55 {offsets = [0, 64], sizes = [2, 32], strides = [1, 1]} : vector<2x128xf32> to vector<2x32xf32>
    %69 = math.tanh %68 : vector<2x32xf32>
    %70 = vector.extract_strided_slice %55 {offsets = [0, 96], sizes = [2, 32], strides = [1, 1]} : vector<2x128xf32> to vector<2x32xf32>
    %71 = arith.negf %70 : vector<2x32xf32>
    %72 = math.exp %71 : vector<2x32xf32>
    %cst_25 = arith.constant 1.000000e+00 : f32
    %73 = vector.broadcast %cst_25 : f32 to vector<2x32xf32>
    %74 = arith.addf %73, %72 : vector<2x32xf32>
    %75 = arith.divf %73, %74 : vector<2x32xf32>
    %76 = arith.mulf %67, %39 : vector<2x32xf32>
    %77 = arith.mulf %61, %69 : vector<2x32xf32>
    %78 = arith.addf %76, %77 : vector<2x32xf32>
    %79 = math.tanh %78 : vector<2x32xf32>
    %80 = arith.mulf %75, %79 : vector<2x32xf32>
    %c0_26 = arith.constant 0 : index
    %81 = arith.index_cast %49 : i32 to index
    %c0_27 = arith.constant 0 : index
    %c0_28 = arith.constant 0 : index
    %82 = vector.load %arg4[%c0_26, %81, %c0_27, %c0_28] : memref<1x8x2x32xf32, #tpu.memory_space<vmem>>, vector<1x1x2x32xf32>
    %83 = vector.shape_cast %82 : vector<1x1x2x32xf32> to vector<2x32xf32>
    %84 = vector.shape_cast %80 : vector<2x32xf32> to vector<1x1x2x32xf32>
    tpu.vector_store %arg4[%c0_26, %81, %c0_27, %c0_28], %84 {strides = array<i32>} : memref<1x8x2x32xf32, #tpu.memory_space<vmem>>, vector<1x1x2x32xf32>,
    %c2_i32_29 = arith.constant 2 : i32
    %c2_i32_30 = arith.constant 2 : i32
    %85 = arith.muli %c2_i32_30, %c2_i32_29 : i32
    %c7_i32_31 = arith.constant 7 : i32
    %86 = arith.subi %c7_i32_31, %85 : i32
    %87 = arith.muli %arg0, %86 : i32
    %88 = arith.addi %c2_i32_29, %87 : i32
    %c0_32 = arith.constant 0 : index
    %89 = arith.index_cast %88 : i32 to index
    %c0_33 = arith.constant 0 : index
    %c0_34 = arith.constant 0 : index
    %90 = vector.load %arg2[%c0_32, %89, %c0_33, %c0_34] : memref<1x8x2x128xf32, #tpu.memory_space<vmem>>, vector<1x1x2x128xf32>
    %91 = vector.shape_cast %90 : vector<1x1x2x128xf32> to vector<2x128xf32>
    %92 = arith.truncf %80 : vector<2x32xf32> to vector<2x32xbf16>
    %cst_35 = arith.constant dense<0.000000e+00> : vector<2x128xf32>
    %93 = tpu.matmul %92, %4, %cst_35 {dimension_numbers = #tpu.dot_dimension_numbers<[1], [0], [0], [1], [0, 0, 1, 1], [], []>} : vector<2x32xbf16>, vector<32x128xbf16>, vector<2x128xf32> -> vector<2x128xf32>
    %94 = arith.addf %91, %93 : vector<2x128xf32>
    %95 = vector.extract_strided_slice %94 {offsets = [0, 0], sizes = [2, 32], strides = [1, 1]} : vector<2x128xf32> to vector<2x32xf32>
    %96 = arith.negf %95 : vector<2x32xf32>
    %97 = math.exp %96 : vector<2x32xf32>
    %cst_36 = arith.constant 1.000000e+00 : f32
    %98 = vector.broadcast %cst_36 : f32 to vector<2x32xf32>
    %99 = arith.addf %98, %97 : vector<2x32xf32>
    %100 = arith.divf %98, %99 : vector<2x32xf32>
    %101 = vector.extract_strided_slice %94 {offsets = [0, 32], sizes = [2, 32], strides = [1, 1]} : vector<2x128xf32> to vector<2x32xf32>
    %102 = arith.negf %101 : vector<2x32xf32>
    %103 = math.exp %102 : vector<2x32xf32>
    %cst_37 = arith.constant 1.000000e+00 : f32
    %104 = vector.broadcast %cst_37 : f32 to vector<2x32xf32>
    %105 = arith.addf %104, %103 : vector<2x32xf32>
    %106 = arith.divf %104, %105 : vector<2x32xf32>
    %107 = vector.extract_strided_slice %94 {offsets = [0, 64], sizes = [2, 32], strides = [1, 1]} : vector<2x128xf32> to vector<2x32xf32>
    %108 = math.tanh %107 : vector<2x32xf32>
    %109 = vector.extract_strided_slice %94 {offsets = [0, 96], sizes = [2, 32], strides = [1, 1]} : vector<2x128xf32> to vector<2x32xf32>
    %110 = arith.negf %109 : vector<2x32xf32>
    %111 = math.exp %110 : vector<2x32xf32>
    %cst_38 = arith.constant 1.000000e+00 : f32
    %112 = vector.broadcast %cst_38 : f32 to vector<2x32xf32>
    %113 = arith.addf %112, %111 : vector<2x32xf32>
    %114 = arith.divf %112, %113 : vector<2x32xf32>
    %115 = arith.mulf %106, %78 : vector<2x32xf32>
    %116 = arith.mulf %100, %108 : vector<2x32xf32>
    %117 = arith.addf %115, %116 : vector<2x32xf32>
    %118 = math.tanh %117 : vector<2x32xf32>
    %119 = arith.mulf %114, %118 : vector<2x32xf32>
    %c0_39 = arith.constant 0 : index
    %120 = arith.index_cast %88 : i32 to index
    %c0_40 = arith.constant 0 : index
    %c0_41 = arith.constant 0 : index
    %121 = vector.load %arg4[%c0_39, %120, %c0_40, %c0_41] : memref<1x8x2x32xf32, #tpu.memory_space<vmem>>, vector<1x1x2x32xf32>
    %122 = vector.shape_cast %121 : vector<1x1x2x32xf32> to vector<2x32xf32>
    %123 = vector.shape_cast %119 : vector<2x32xf32> to vector<1x1x2x32xf32>
    tpu.vector_store %arg4[%c0_39, %120, %c0_40, %c0_41], %123 {strides = array<i32>} : memref<1x8x2x32xf32, #tpu.memory_space<vmem>>, vector<1x1x2x32xf32>,
    %c3_i32 = arith.constant 3 : i32
    %c2_i32_42 = arith.constant 2 : i32
    %124 = arith.muli %c2_i32_42, %c3_i32 : i32
    %c7_i32_43 = arith.constant 7 : i32
    %125 = arith.subi %c7_i32_43, %124 : i32
    %126 = arith.muli %arg0, %125 : i32
    %127 = arith.addi %c3_i32, %126 : i32
    %c0_44 = arith.constant 0 : index
    %128 = arith.index_cast %127 : i32 to index
    %c0_45 = arith.constant 0 : index
    %c0_46 = arith.constant 0 : index
    %129 = vector.load %arg2[%c0_44, %128, %c0_45, %c0_46] : memref<1x8x2x128xf32, #tpu.memory_space<vmem>>, vector<1x1x2x128xf32>
    %130 = vector.shape_cast %129 : vector<1x1x2x128xf32> to vector<2x128xf32>
    %131 = arith.truncf %119 : vector<2x32xf32> to vector<2x32xbf16>
    %cst_47 = arith.constant dense<0.000000e+00> : vector<2x128xf32>
    %132 = tpu.matmul %131, %4, %cst_47 {dimension_numbers = #tpu.dot_dimension_numbers<[1], [0], [0], [1], [0, 0, 1, 1], [], []>} : vector<2x32xbf16>, vector<32x128xbf16>, vector<2x128xf32> -> vector<2x128xf32>
    %133 = arith.addf %130, %132 : vector<2x128xf32>
    %134 = vector.extract_strided_slice %133 {offsets = [0, 0], sizes = [2, 32], strides = [1, 1]} : vector<2x128xf32> to vector<2x32xf32>
    %135 = arith.negf %134 : vector<2x32xf32>
    %136 = math.exp %135 : vector<2x32xf32>
    %cst_48 = arith.constant 1.000000e+00 : f32
    %137 = vector.broadcast %cst_48 : f32 to vector<2x32xf32>
    %138 = arith.addf %137, %136 : vector<2x32xf32>
    %139 = arith.divf %137, %138 : vector<2x32xf32>
    %140 = vector.extract_strided_slice %133 {offsets = [0, 32], sizes = [2, 32], strides = [1, 1]} : vector<2x128xf32> to vector<2x32xf32>
    %141 = arith.negf %140 : vector<2x32xf32>
    %142 = math.exp %141 : vector<2x32xf32>
    %cst_49 = arith.constant 1.000000e+00 : f32
    %143 = vector.broadcast %cst_49 : f32 to vector<2x32xf32>
    %144 = arith.addf %143, %142 : vector<2x32xf32>
    %145 = arith.divf %143, %144 : vector<2x32xf32>
    %146 = vector.extract_strided_slice %133 {offsets = [0, 64], sizes = [2, 32], strides = [1, 1]} : vector<2x128xf32> to vector<2x32xf32>
    %147 = math.tanh %146 : vector<2x32xf32>
    %148 = vector.extract_strided_slice %133 {offsets = [0, 96], sizes = [2, 32], strides = [1, 1]} : vector<2x128xf32> to vector<2x32xf32>
    %149 = arith.negf %148 : vector<2x32xf32>
    %150 = math.exp %149 : vector<2x32xf32>
    %cst_50 = arith.constant 1.000000e+00 : f32
    %151 = vector.broadcast %cst_50 : f32 to vector<2x32xf32>
    %152 = arith.addf %151, %150 : vector<2x32xf32>
    %153 = arith.divf %151, %152 : vector<2x32xf32>
    %154 = arith.mulf %145, %117 : vector<2x32xf32>
    %155 = arith.mulf %139, %147 : vector<2x32xf32>
    %156 = arith.addf %154, %155 : vector<2x32xf32>
    %157 = math.tanh %156 : vector<2x32xf32>
    %158 = arith.mulf %153, %157 : vector<2x32xf32>
    %c0_51 = arith.constant 0 : index
    %159 = arith.index_cast %127 : i32 to index
    %c0_52 = arith.constant 0 : index
    %c0_53 = arith.constant 0 : index
    %160 = vector.load %arg4[%c0_51, %159, %c0_52, %c0_53] : memref<1x8x2x32xf32, #tpu.memory_space<vmem>>, vector<1x1x2x32xf32>
    %161 = vector.shape_cast %160 : vector<1x1x2x32xf32> to vector<2x32xf32>
    %162 = vector.shape_cast %158 : vector<2x32xf32> to vector<1x1x2x32xf32>
    tpu.vector_store %arg4[%c0_51, %159, %c0_52, %c0_53], %162 {strides = array<i32>} : memref<1x8x2x32xf32, #tpu.memory_space<vmem>>, vector<1x1x2x32xf32>,
    %c4_i32 = arith.constant 4 : i32
    %c2_i32_54 = arith.constant 2 : i32
    %163 = arith.muli %c2_i32_54, %c4_i32 : i32
    %c7_i32_55 = arith.constant 7 : i32
    %164 = arith.subi %c7_i32_55, %163 : i32
    %165 = arith.muli %arg0, %164 : i32
    %166 = arith.addi %c4_i32, %165 : i32
    %c0_56 = arith.constant 0 : index
    %167 = arith.index_cast %166 : i32 to index
    %c0_57 = arith.constant 0 : index
    %c0_58 = arith.constant 0 : index
    %168 = vector.load %arg2[%c0_56, %167, %c0_57, %c0_58] : memref<1x8x2x128xf32, #tpu.memory_space<vmem>>, vector<1x1x2x128xf32>
    %169 = vector.shape_cast %168 : vector<1x1x2x128xf32> to vector<2x128xf32>
    %170 = arith.truncf %158 : vector<2x32xf32> to vector<2x32xbf16>
    %cst_59 = arith.constant dense<0.000000e+00> : vector<2x128xf32>
    %171 = tpu.matmul %170, %4, %cst_59 {dimension_numbers = #tpu.dot_dimension_numbers<[1], [0], [0], [1], [0, 0, 1, 1], [], []>} : vector<2x32xbf16>, vector<32x128xbf16>, vector<2x128xf32> -> vector<2x128xf32>
    %172 = arith.addf %169, %171 : vector<2x128xf32>
    %173 = vector.extract_strided_slice %172 {offsets = [0, 0], sizes = [2, 32], strides = [1, 1]} : vector<2x128xf32> to vector<2x32xf32>
    %174 = arith.negf %173 : vector<2x32xf32>
    %175 = math.exp %174 : vector<2x32xf32>
    %cst_60 = arith.constant 1.000000e+00 : f32
    %176 = vector.broadcast %cst_60 : f32 to vector<2x32xf32>
    %177 = arith.addf %176, %175 : vector<2x32xf32>
    %178 = arith.divf %176, %177 : vector<2x32xf32>
    %179 = vector.extract_strided_slice %172 {offsets = [0, 32], sizes = [2, 32], strides = [1, 1]} : vector<2x128xf32> to vector<2x32xf32>
    %180 = arith.negf %179 : vector<2x32xf32>
    %181 = math.exp %180 : vector<2x32xf32>
    %cst_61 = arith.constant 1.000000e+00 : f32
    %182 = vector.broadcast %cst_61 : f32 to vector<2x32xf32>
    %183 = arith.addf %182, %181 : vector<2x32xf32>
    %184 = arith.divf %182, %183 : vector<2x32xf32>
    %185 = vector.extract_strided_slice %172 {offsets = [0, 64], sizes = [2, 32], strides = [1, 1]} : vector<2x128xf32> to vector<2x32xf32>
    %186 = math.tanh %185 : vector<2x32xf32>
    %187 = vector.extract_strided_slice %172 {offsets = [0, 96], sizes = [2, 32], strides = [1, 1]} : vector<2x128xf32> to vector<2x32xf32>
    %188 = arith.negf %187 : vector<2x32xf32>
    %189 = math.exp %188 : vector<2x32xf32>
    %cst_62 = arith.constant 1.000000e+00 : f32
    %190 = vector.broadcast %cst_62 : f32 to vector<2x32xf32>
    %191 = arith.addf %190, %189 : vector<2x32xf32>
    %192 = arith.divf %190, %191 : vector<2x32xf32>
    %193 = arith.mulf %184, %156 : vector<2x32xf32>
    %194 = arith.mulf %178, %186 : vector<2x32xf32>
    %195 = arith.addf %193, %194 : vector<2x32xf32>
    %196 = math.tanh %195 : vector<2x32xf32>
    %197 = arith.mulf %192, %196 : vector<2x32xf32>
    %c0_63 = arith.constant 0 : index
    %198 = arith.index_cast %166 : i32 to index
    %c0_64 = arith.constant 0 : index
    %c0_65 = arith.constant 0 : index
    %199 = vector.load %arg4[%c0_63, %198, %c0_64, %c0_65] : memref<1x8x2x32xf32, #tpu.memory_space<vmem>>, vector<1x1x2x32xf32>
    %200 = vector.shape_cast %199 : vector<1x1x2x32xf32> to vector<2x32xf32>
    %201 = vector.shape_cast %197 : vector<2x32xf32> to vector<1x1x2x32xf32>
    tpu.vector_store %arg4[%c0_63, %198, %c0_64, %c0_65], %201 {strides = array<i32>} : memref<1x8x2x32xf32, #tpu.memory_space<vmem>>, vector<1x1x2x32xf32>,
    %c5_i32 = arith.constant 5 : i32
    %c2_i32_66 = arith.constant 2 : i32
    %202 = arith.muli %c2_i32_66, %c5_i32 : i32
    %c7_i32_67 = arith.constant 7 : i32
    %203 = arith.subi %c7_i32_67, %202 : i32
    %204 = arith.muli %arg0, %203 : i32
    %205 = arith.addi %c5_i32, %204 : i32
    %c0_68 = arith.constant 0 : index
    %206 = arith.index_cast %205 : i32 to index
    %c0_69 = arith.constant 0 : index
    %c0_70 = arith.constant 0 : index
    %207 = vector.load %arg2[%c0_68, %206, %c0_69, %c0_70] : memref<1x8x2x128xf32, #tpu.memory_space<vmem>>, vector<1x1x2x128xf32>
    %208 = vector.shape_cast %207 : vector<1x1x2x128xf32> to vector<2x128xf32>
    %209 = arith.truncf %197 : vector<2x32xf32> to vector<2x32xbf16>
    %cst_71 = arith.constant dense<0.000000e+00> : vector<2x128xf32>
    %210 = tpu.matmul %209, %4, %cst_71 {dimension_numbers = #tpu.dot_dimension_numbers<[1], [0], [0], [1], [0, 0, 1, 1], [], []>} : vector<2x32xbf16>, vector<32x128xbf16>, vector<2x128xf32> -> vector<2x128xf32>
    %211 = arith.addf %208, %210 : vector<2x128xf32>
    %212 = vector.extract_strided_slice %211 {offsets = [0, 0], sizes = [2, 32], strides = [1, 1]} : vector<2x128xf32> to vector<2x32xf32>
    %213 = arith.negf %212 : vector<2x32xf32>
    %214 = math.exp %213 : vector<2x32xf32>
    %cst_72 = arith.constant 1.000000e+00 : f32
    %215 = vector.broadcast %cst_72 : f32 to vector<2x32xf32>
    %216 = arith.addf %215, %214 : vector<2x32xf32>
    %217 = arith.divf %215, %216 : vector<2x32xf32>
    %218 = vector.extract_strided_slice %211 {offsets = [0, 32], sizes = [2, 32], strides = [1, 1]} : vector<2x128xf32> to vector<2x32xf32>
    %219 = arith.negf %218 : vector<2x32xf32>
    %220 = math.exp %219 : vector<2x32xf32>
    %cst_73 = arith.constant 1.000000e+00 : f32
    %221 = vector.broadcast %cst_73 : f32 to vector<2x32xf32>
    %222 = arith.addf %221, %220 : vector<2x32xf32>
    %223 = arith.divf %221, %222 : vector<2x32xf32>
    %224 = vector.extract_strided_slice %211 {offsets = [0, 64], sizes = [2, 32], strides = [1, 1]} : vector<2x128xf32> to vector<2x32xf32>
    %225 = math.tanh %224 : vector<2x32xf32>
    %226 = vector.extract_strided_slice %211 {offsets = [0, 96], sizes = [2, 32], strides = [1, 1]} : vector<2x128xf32> to vector<2x32xf32>
    %227 = arith.negf %226 : vector<2x32xf32>
    %228 = math.exp %227 : vector<2x32xf32>
    %cst_74 = arith.constant 1.000000e+00 : f32
    %229 = vector.broadcast %cst_74 : f32 to vector<2x32xf32>
    %230 = arith.addf %229, %228 : vector<2x32xf32>
    %231 = arith.divf %229, %230 : vector<2x32xf32>
    %232 = arith.mulf %223, %195 : vector<2x32xf32>
    %233 = arith.mulf %217, %225 : vector<2x32xf32>
    %234 = arith.addf %232, %233 : vector<2x32xf32>
    %235 = math.tanh %234 : vector<2x32xf32>
    %236 = arith.mulf %231, %235 : vector<2x32xf32>
    %c0_75 = arith.constant 0 : index
    %237 = arith.index_cast %205 : i32 to index
    %c0_76 = arith.constant 0 : index
    %c0_77 = arith.constant 0 : index
    %238 = vector.load %arg4[%c0_75, %237, %c0_76, %c0_77] : memref<1x8x2x32xf32, #tpu.memory_space<vmem>>, vector<1x1x2x32xf32>
    %239 = vector.shape_cast %238 : vector<1x1x2x32xf32> to vector<2x32xf32>
    %240 = vector.shape_cast %236 : vector<2x32xf32> to vector<1x1x2x32xf32>
    tpu.vector_store %arg4[%c0_75, %237, %c0_76, %c0_77], %240 {strides = array<i32>} : memref<1x8x2x32xf32, #tpu.memory_space<vmem>>, vector<1x1x2x32xf32>,
    %c6_i32 = arith.constant 6 : i32
    %c2_i32_78 = arith.constant 2 : i32
    %241 = arith.muli %c2_i32_78, %c6_i32 : i32
    %c7_i32_79 = arith.constant 7 : i32
    %242 = arith.subi %c7_i32_79, %241 : i32
    %243 = arith.muli %arg0, %242 : i32
    %244 = arith.addi %c6_i32, %243 : i32
    %c0_80 = arith.constant 0 : index
    %245 = arith.index_cast %244 : i32 to index
    %c0_81 = arith.constant 0 : index
    %c0_82 = arith.constant 0 : index
    %246 = vector.load %arg2[%c0_80, %245, %c0_81, %c0_82] : memref<1x8x2x128xf32, #tpu.memory_space<vmem>>, vector<1x1x2x128xf32>
    %247 = vector.shape_cast %246 : vector<1x1x2x128xf32> to vector<2x128xf32>
    %248 = arith.truncf %236 : vector<2x32xf32> to vector<2x32xbf16>
    %cst_83 = arith.constant dense<0.000000e+00> : vector<2x128xf32>
    %249 = tpu.matmul %248, %4, %cst_83 {dimension_numbers = #tpu.dot_dimension_numbers<[1], [0], [0], [1], [0, 0, 1, 1], [], []>} : vector<2x32xbf16>, vector<32x128xbf16>, vector<2x128xf32> -> vector<2x128xf32>
    %250 = arith.addf %247, %249 : vector<2x128xf32>
    %251 = vector.extract_strided_slice %250 {offsets = [0, 0], sizes = [2, 32], strides = [1, 1]} : vector<2x128xf32> to vector<2x32xf32>
    %252 = arith.negf %251 : vector<2x32xf32>
    %253 = math.exp %252 : vector<2x32xf32>
    %cst_84 = arith.constant 1.000000e+00 : f32
    %254 = vector.broadcast %cst_84 : f32 to vector<2x32xf32>
    %255 = arith.addf %254, %253 : vector<2x32xf32>
    %256 = arith.divf %254, %255 : vector<2x32xf32>
    %257 = vector.extract_strided_slice %250 {offsets = [0, 32], sizes = [2, 32], strides = [1, 1]} : vector<2x128xf32> to vector<2x32xf32>
    %258 = arith.negf %257 : vector<2x32xf32>
    %259 = math.exp %258 : vector<2x32xf32>
    %cst_85 = arith.constant 1.000000e+00 : f32
    %260 = vector.broadcast %cst_85 : f32 to vector<2x32xf32>
    %261 = arith.addf %260, %259 : vector<2x32xf32>
    %262 = arith.divf %260, %261 : vector<2x32xf32>
    %263 = vector.extract_strided_slice %250 {offsets = [0, 64], sizes = [2, 32], strides = [1, 1]} : vector<2x128xf32> to vector<2x32xf32>
    %264 = math.tanh %263 : vector<2x32xf32>
    %265 = vector.extract_strided_slice %250 {offsets = [0, 96], sizes = [2, 32], strides = [1, 1]} : vector<2x128xf32> to vector<2x32xf32>
    %266 = arith.negf %265 : vector<2x32xf32>
    %267 = math.exp %266 : vector<2x32xf32>
    %cst_86 = arith.constant 1.000000e+00 : f32
    %268 = vector.broadcast %cst_86 : f32 to vector<2x32xf32>
    %269 = arith.addf %268, %267 : vector<2x32xf32>
    %270 = arith.divf %268, %269 : vector<2x32xf32>
    %271 = arith.mulf %262, %234 : vector<2x32xf32>
    %272 = arith.mulf %256, %264 : vector<2x32xf32>
    %273 = arith.addf %271, %272 : vector<2x32xf32>
    %274 = math.tanh %273 : vector<2x32xf32>
    %275 = arith.mulf %270, %274 : vector<2x32xf32>
    %c0_87 = arith.constant 0 : index
    %276 = arith.index_cast %244 : i32 to index
    %c0_88 = arith.constant 0 : index
    %c0_89 = arith.constant 0 : index
    %277 = vector.load %arg4[%c0_87, %276, %c0_88, %c0_89] : memref<1x8x2x32xf32, #tpu.memory_space<vmem>>, vector<1x1x2x32xf32>
    %278 = vector.shape_cast %277 : vector<1x1x2x32xf32> to vector<2x32xf32>
    %279 = vector.shape_cast %275 : vector<2x32xf32> to vector<1x1x2x32xf32>
    tpu.vector_store %arg4[%c0_87, %276, %c0_88, %c0_89], %279 {strides = array<i32>} : memref<1x8x2x32xf32, #tpu.memory_space<vmem>>, vector<1x1x2x32xf32>,
    %c7_i32_90 = arith.constant 7 : i32
    %c2_i32_91 = arith.constant 2 : i32
    %280 = arith.muli %c2_i32_91, %c7_i32_90 : i32
    %c7_i32_92 = arith.constant 7 : i32
    %281 = arith.subi %c7_i32_92, %280 : i32
    %282 = arith.muli %arg0, %281 : i32
    %283 = arith.addi %c7_i32_90, %282 : i32
    %c0_93 = arith.constant 0 : index
    %284 = arith.index_cast %283 : i32 to index
    %c0_94 = arith.constant 0 : index
    %c0_95 = arith.constant 0 : index
    %285 = vector.load %arg2[%c0_93, %284, %c0_94, %c0_95] : memref<1x8x2x128xf32, #tpu.memory_space<vmem>>, vector<1x1x2x128xf32>
    %286 = vector.shape_cast %285 : vector<1x1x2x128xf32> to vector<2x128xf32>
    %287 = arith.truncf %275 : vector<2x32xf32> to vector<2x32xbf16>
    %cst_96 = arith.constant dense<0.000000e+00> : vector<2x128xf32>
    %288 = tpu.matmul %287, %4, %cst_96 {dimension_numbers = #tpu.dot_dimension_numbers<[1], [0], [0], [1], [0, 0, 1, 1], [], []>} : vector<2x32xbf16>, vector<32x128xbf16>, vector<2x128xf32> -> vector<2x128xf32>
    %289 = arith.addf %286, %288 : vector<2x128xf32>
    %290 = vector.extract_strided_slice %289 {offsets = [0, 0], sizes = [2, 32], strides = [1, 1]} : vector<2x128xf32> to vector<2x32xf32>
    %291 = arith.negf %290 : vector<2x32xf32>
    %292 = math.exp %291 : vector<2x32xf32>
    %cst_97 = arith.constant 1.000000e+00 : f32
    %293 = vector.broadcast %cst_97 : f32 to vector<2x32xf32>
    %294 = arith.addf %293, %292 : vector<2x32xf32>
    %295 = arith.divf %293, %294 : vector<2x32xf32>
    %296 = vector.extract_strided_slice %289 {offsets = [0, 32], sizes = [2, 32], strides = [1, 1]} : vector<2x128xf32> to vector<2x32xf32>
    %297 = arith.negf %296 : vector<2x32xf32>
    %298 = math.exp %297 : vector<2x32xf32>
    %cst_98 = arith.constant 1.000000e+00 : f32
    %299 = vector.broadcast %cst_98 : f32 to vector<2x32xf32>
    %300 = arith.addf %299, %298 : vector<2x32xf32>
    %301 = arith.divf %299, %300 : vector<2x32xf32>
    %302 = vector.extract_strided_slice %289 {offsets = [0, 64], sizes = [2, 32], strides = [1, 1]} : vector<2x128xf32> to vector<2x32xf32>
    %303 = math.tanh %302 : vector<2x32xf32>
    %304 = vector.extract_strided_slice %289 {offsets = [0, 96], sizes = [2, 32], strides = [1, 1]} : vector<2x128xf32> to vector<2x32xf32>
    %305 = arith.negf %304 : vector<2x32xf32>
    %306 = math.exp %305 : vector<2x32xf32>
    %cst_99 = arith.constant 1.000000e+00 : f32
    %307 = vector.broadcast %cst_99 : f32 to vector<2x32xf32>
    %308 = arith.addf %307, %306 : vector<2x32xf32>
    %309 = arith.divf %307, %308 : vector<2x32xf32>
    %310 = arith.mulf %301, %273 : vector<2x32xf32>
    %311 = arith.mulf %295, %303 : vector<2x32xf32>
    %312 = arith.addf %310, %311 : vector<2x32xf32>
    %313 = math.tanh %312 : vector<2x32xf32>
    %314 = arith.mulf %309, %313 : vector<2x32xf32>
    %c0_100 = arith.constant 0 : index
    %315 = arith.index_cast %283 : i32 to index
    %c0_101 = arith.constant 0 : index
    %c0_102 = arith.constant 0 : index
    %316 = vector.load %arg4[%c0_100, %315, %c0_101, %c0_102] : memref<1x8x2x32xf32, #tpu.memory_space<vmem>>, vector<1x1x2x32xf32>
    %317 = vector.shape_cast %316 : vector<1x1x2x32xf32> to vector<2x32xf32>
    %318 = vector.shape_cast %314 : vector<2x32xf32> to vector<1x1x2x32xf32>
    tpu.vector_store %arg4[%c0_100, %315, %c0_101, %c0_102], %318 {strides = array<i32>} : memref<1x8x2x32xf32, #tpu.memory_space<vmem>>, vector<1x1x2x32xf32>,
    %c8_i32 = arith.constant 8 : i32
    %c0_103 = arith.constant 0 : index
    %c0_104 = arith.constant 0 : index
    %319 = vector.load %arg7[%c0_103, %c0_104] : memref<2x32xf32, #tpu.memory_space<vmem>>, vector<2x32xf32>
    tpu.vector_store %arg7[%c0_103, %c0_104], %314 {strides = array<i32>} : memref<2x32xf32, #tpu.memory_space<vmem>>, vector<2x32xf32>,
    %c0_105 = arith.constant 0 : index
    %c0_106 = arith.constant 0 : index
    %320 = vector.load %arg8[%c0_105, %c0_106] : memref<2x32xf32, #tpu.memory_space<vmem>>, vector<2x32xf32>
    tpu.vector_store %arg8[%c0_105, %c0_106], %312 {strides = array<i32>} : memref<2x32xf32, #tpu.memory_space<vmem>>, vector<2x32xf32>,
    %c1_i32_107 = arith.constant 1 : i32
    %321 = arith.cmpi eq, %arg1, %c1_i32_107 : i32
    %322 = arith.extui %321 : i1 to i32
    %c0_i32_108 = arith.constant 0 : i32
    %323 = arith.cmpi ne, %322, %c0_i32_108 : i32
    scf.if %323 {
      %c0_109 = arith.constant 0 : index
      %c0_110 = arith.constant 0 : index
      %c0_111 = arith.constant 0 : index
      %324 = vector.load %arg5[%c0_109, %c0_110, %c0_111] : memref<1x2x32xf32, #tpu.memory_space<vmem>>, vector<1x2x32xf32>
      %325 = vector.shape_cast %324 : vector<1x2x32xf32> to vector<2x32xf32>
      %326 = vector.shape_cast %314 : vector<2x32xf32> to vector<1x2x32xf32>
      tpu.vector_store %arg5[%c0_109, %c0_110, %c0_111], %326 {strides = array<i32>} : memref<1x2x32xf32, #tpu.memory_space<vmem>>, vector<1x2x32xf32>,
      %c0_112 = arith.constant 0 : index
      %c0_113 = arith.constant 0 : index
      %c0_114 = arith.constant 0 : index
      %327 = vector.load %arg6[%c0_112, %c0_113, %c0_114] : memref<1x2x32xf32, #tpu.memory_space<vmem>>, vector<1x2x32xf32>
      %328 = vector.shape_cast %327 : vector<1x2x32xf32> to vector<2x32xf32>
      %329 = vector.shape_cast %312 : vector<2x32xf32> to vector<1x2x32xf32>
      tpu.vector_store %arg6[%c0_112, %c0_113, %c0_114], %329 {strides = array<i32>} : memref<1x2x32xf32, #tpu.memory_space<vmem>>, vector<1x2x32xf32>,
    } else {
    }
    return
  }
  func.func @transform_0(%arg0: i32, %arg1: i32) -> (i32, i32, i32, i32) {
    %c2_i32 = arith.constant 2 : i32
    %0 = arith.muli %c2_i32, %arg1 : i32
    %c1_i32 = arith.constant 1 : i32
    %1 = arith.subi %c1_i32, %0 : i32
    %2 = arith.muli %arg0, %1 : i32
    %3 = arith.addi %arg1, %2 : i32
    %c0_i32 = arith.constant 0 : i32
    %c0_i32_0 = arith.constant 0 : i32
    %c0_i32_1 = arith.constant 0 : i32
    return %arg0, %3, %c0_i32, %c0_i32_0 : i32, i32, i32, i32
  }
  func.func @transform_1(%arg0: i32, %arg1: i32) -> (i32, i32, i32) {
    %c0_i32 = arith.constant 0 : i32
    %c0_i32_0 = arith.constant 0 : i32
    %c0_i32_1 = arith.constant 0 : i32
    return %arg0, %c0_i32, %c0_i32_0 : i32, i32, i32
  }
  func.func @transform_2(%arg0: i32, %arg1: i32) -> (i32, i32, i32, i32) {
    %c2_i32 = arith.constant 2 : i32
    %0 = arith.muli %c2_i32, %arg1 : i32
    %c1_i32 = arith.constant 1 : i32
    %1 = arith.subi %c1_i32, %0 : i32
    %2 = arith.muli %arg0, %1 : i32
    %3 = arith.addi %arg1, %2 : i32
    %c0_i32 = arith.constant 0 : i32
    %c0_i32_0 = arith.constant 0 : i32
    %c0_i32_1 = arith.constant 0 : i32
    return %arg0, %3, %c0_i32, %c0_i32_0 : i32, i32, i32, i32
  }
  func.func @transform_3(%arg0: i32, %arg1: i32) -> (i32, i32, i32) {
    %c0_i32 = arith.constant 0 : i32
    %c0_i32_0 = arith.constant 0 : i32
    %c0_i32_1 = arith.constant 0 : i32
    return %arg0, %c0_i32, %c0_i32_0 : i32, i32, i32
  }
  func.func @transform_4(%arg0: i32, %arg1: i32) -> (i32, i32, i32) {
    %c0_i32 = arith.constant 0 : i32
    %c0_i32_0 = arith.constant 0 : i32
    %c0_i32_1 = arith.constant 0 : i32
    return %arg0, %c0_i32, %c0_i32_0 : i32, i32, i32
  }
}

</mosaic_0001>

<llo_original>
// kernel: tpu_custom_call.1
$region0: #{tpu_custom_call.1}
  #allocation0 [shape = 'u32[]', space=smem, size = 0x4, offset = 0x4, fixed_abs, tag = 'smem constant byte address 0x4 - core index']
  #allocation1 [shape = 'u32[144,128]{1,0:T(1,128)}', space=vmem, size = 0x12000, scoped, tag = 'internal scratch']
  #allocation2 [shape = 'f32[2,32]{1,0:T(2,128)}', space=vmem, size = 0x400, scoped, tag = 'scratch operand']
  #allocation3 [shape = 'f32[2,32]{1,0:T(2,128)}', space=vmem, size = 0x400, scoped, tag = 'scratch operand']
  %s0 = inlined_call_operand.hbm [shape: f32[2,16,2,128], index: 0, kind: input, shape index: {}]
  %s1 = inlined_call_operand.hbm [shape: bf16[2,32,128], index: 1, kind: input, shape index: {}]
  %s2 = inlined_call_operand.hbm [shape: f32[2,16,2,32], index: 2, kind: output, shape index: {0}]
  %s3 = inlined_call_operand.hbm [shape: f32[2,2,32], index: 3, kind: output, shape index: {1}]
  %s4 = inlined_call_operand.hbm [shape: f32[2,2,32], index: 4, kind: output, shape index: {2}]
  %5 = xla_tuple %s2, %s3, %s4
  %s6 = sld [smem:[#allocation0]]
  $region73: #{tpu_custom_call.1} parent=0
    _
  %s8 = ssub.s32 1, %s6
  %s9 = scalar_select 0, %s8, %s6
  $region1: #{tpu_custom_call.1} parent=0
    #allocation4 [shape = 'u8[16384]{0}', space=vmem, size = 0x4000, scoped, tag = 'input window, operand 0']
    #allocation5 [shape = 's32[2]{0}', space=sflag, size = 0x8, scoped, tag = 'scoped memory for tpu_custom_call.1']
    #allocation6 [shape = 's32[2]{0}', space=sflag, size = 0x8, scoped, tag = 'scoped memory for tpu_custom_call.1']
    #allocation7 [shape = 'u8[16384]{0}', space=vmem, size = 0x4000, scoped, tag = 'input window, operand 1']
    #allocation8 [shape = 's32[2]{0}', space=sflag, size = 0x8, scoped, tag = 'scoped memory for tpu_custom_call.1']
    #allocation9 [shape = 'u8[16384]{0}', space=vmem, size = 0x4000, scoped, tag = 'output window, operand 0']
    #allocation10 [shape = 'u8[2048]{0}', space=vmem, size = 0x800, scoped, tag = 'output window, operand 1']
    #allocation11 [shape = 's32[2]{0}', space=sflag, size = 0x8, scoped, tag = 'scoped memory for tpu_custom_call.1']
    #allocation12 [shape = 'u8[2048]{0}', space=vmem, size = 0x800, scoped, tag = 'output window, operand 2']
    %10 = vsyncpa [#allocation5], 0
    %s11 = scalar_lea.sflag [#allocation5], 1
    %12 = vsyncpa %s11, 0
    %13 = vsyncpa [#allocation8], 0
    %s14 = scalar_lea.sflag [#allocation8], 1
    %15 = vsyncpa %s14, 0
    %16 = vsyncpa [#allocation6], 0
    %s17 = scalar_lea.sflag [#allocation6], 1
    %18 = vsyncpa %s17, 0
    %19 = vsyncpa [#allocation11], 0
    %s20 = scalar_lea.sflag [#allocation11], 1
    %21 = vsyncpa %s20, 0
    loop: start=0, step=1, limit=6
    $region2: #{tpu_custom_call.1} parent=1 // loop_pre_header
      _
    $region3: #{tpu_custom_call.1} parent=1 // loop_header
      %s23 = sphi 0, %s27
      %p24 = scmp.ge.s32.totalorder %s23, 6
      %s30 = sphi 0, %s42
      %s31 = sphi 0, %s38
      %s32 = sphi 0, %s30
      %s33 = sphi 0, %s31
      %s34 = sphi 0, %s32
      %s35 = sphi 0, %s33
      %s55 = sphi 0, %s57
      %s58 = sphi 0, %s55
      %s59 = sphi 0, %s58
      %s75 = sphi 0, %s59
      %s81 = sphi 0, %s83
      %s84 = sphi 0, %s81
      %s85 = sphi 0, %s84
      %s101 = sphi 0, %s85
      %s117 = sphi 0, %s119
      %s120 = sphi 0, %s117
      %s121 = sphi 0, %s120
      %s137 = sphi 0, %s121
      %s143 = sphi 0, %s145
      %s146 = sphi 0, %s143
      %s147 = sphi 0, %s146
      %s163 = sphi 0, %s147
      %s169 = sphi 0, %s171
      %s172 = sphi 0, %s169
      %s173 = sphi 0, %s172
      %s189 = sphi 0, %s173
    $region4: #{tpu_custom_call.1} parent=1 // loop_header_branch
      %26 = sbr.rel (%p24) target = $region8
    $region5: #{tpu_custom_call.1} parent=1 // loop_body
      %s28 = ssub.s32 %s23, 1
      %s29 = ssub.s32 %s23, 2
      %s36 = sadd.s32 1, %s31
      %p37 = scmp.ge.s32.totalorder %s36, 2
      %s38 = scalar_select %p37, 0, %s36
      %s39 = sadd.s32 1, %s30
      %s40 = scalar_select %p37, %s39, %s30
      %p41 = scmp.ge.s32.totalorder %s40, 2
      %s42 = scalar_select %p41, 0, %s40
      %s43 = smul.u32 %s31, 2
      %s44 = ssub.s32 1, %s43
      %s45 = smul.u32 %s30, %s44
      %s46 = sadd.s32 %s31, %s45
      %s47 = smul.u32 %s38, 2
      %s48 = ssub.s32 1, %s47
      %s49 = smul.u32 %s42, %s48
      %s50 = sadd.s32 %s38, %s49
      %s51 = ssub.s32 %s30, %s42
      %s52 = ssub.s32 %s46, %s50
      %s53 = sor.u32 %s51, %s52
      %p54 = scmp.eq.s32.totalorder %s53, 0
      %s56 = sadd.s32 %s55, 1
      %s57 = scalar_select %p54, %s55, %s56
      %p60 = pneg %p54
      %p61 = scmp.eq.s32.totalorder %s23, 3
      %p62 = por %p60, %p61
      %p63 = scmp.ne.s32.totalorder %s55, %s58
      %p64 = scmp.eq.s32.totalorder %s23, 0
      %p65 = por %p63, %p64
      %p66 = scmp.ne.s32.totalorder %s55, %s58
      %p67 = scmp.eq.s32.totalorder %s28, 3
      %p68 = por %p66, %p67
      %p69 = scmp.ne.s32.totalorder %s58, %s59
      %p70 = scmp.eq.s32.totalorder %s28, 0
      %p71 = por %p69, %p70
      %p72 = scmp.ne.s32.totalorder %s58, %s59
      %p73 = scmp.eq.s32.totalorder %s29, 3
      %p74 = por %p72, %p73
      %p76 = scmp.ne.s32.totalorder %s59, %s75
      %p77 = scmp.eq.s32.totalorder %s29, 0
      %p78 = por %p76, %p77
      %s79 = ssub.s32 %s30, %s42
      %p80 = scmp.eq.s32.totalorder %s79, 0
      %s82 = sadd.s32 %s81, 1
      %s83 = scalar_select %p80, %s81, %s82
      %p86 = pneg %p80
      %p87 = scmp.eq.s32.totalorder %s23, 3
      %p88 = por %p86, %p87
      %p89 = scmp.ne.s32.totalorder %s81, %s84
      %p90 = scmp.eq.s32.totalorder %s23, 0
      %p91 = por %p89, %p90
      %p92 = scmp.ne.s32.totalorder %s81, %s84
      %p93 = scmp.eq.s32.totalorder %s28, 3
      %p94 = por %p92, %p93
      %p95 = scmp.ne.s32.totalorder %s84, %s85
      %p96 = scmp.eq.s32.totalorder %s28, 0
      %p97 = por %p95, %p96
      %p98 = scmp.ne.s32.totalorder %s84, %s85
      %p99 = scmp.eq.s32.totalorder %s29, 3
      %p100 = por %p98, %p99
      %p102 = scmp.ne.s32.totalorder %s85, %s101
      %p103 = scmp.eq.s32.totalorder %s29, 0
      %p104 = por %p102, %p103
      %s105 = smul.u32 %s31, 2
      %s106 = ssub.s32 1, %s105
      %s107 = smul.u32 %s30, %s106
      %s108 = sadd.s32 %s31, %s107
      %s109 = smul.u32 %s38, 2
      %s110 = ssub.s32 1, %s109
      %s111 = smul.u32 %s42, %s110
      %s112 = sadd.s32 %s38, %s111
      %s113 = ssub.s32 %s30, %s42
      %s114 = ssub.s32 %s108, %s112
      %s115 = sor.u32 %s113, %s114
      %p116 = scmp.eq.s32.totalorder %s115, 0
      %s118 = sadd.s32 %s117, 1
      %s119 = scalar_select %p116, %s117, %s118
      %p122 = pneg %p116
      %p123 = scmp.eq.s32.totalorder %s23, 3
      %p124 = por %p122, %p123
      %p125 = scmp.ne.s32.totalorder %s117, %s120
      %p126 = scmp.eq.s32.totalorder %s23, 0
      %p127 = por %p125, %p126
      %p128 = scmp.ne.s32.totalorder %s117, %s120
      %p129 = scmp.eq.s32.totalorder %s28, 3
      %p130 = por %p128, %p129
      %p131 = scmp.ne.s32.totalorder %s120, %s121
      %p132 = scmp.eq.s32.totalorder %s28, 0
      %p133 = por %p131, %p132
      %p134 = scmp.ne.s32.totalorder %s120, %s121
      %p135 = scmp.eq.s32.totalorder %s29, 3
      %p136 = por %p134, %p135
      %p138 = scmp.ne.s32.totalorder %s121, %s137
      %p139 = scmp.eq.s32.totalorder %s29, 0
      %p140 = por %p138, %p139
      %s141 = ssub.s32 %s30, %s42
      %p142 = scmp.eq.s32.totalorder %s141, 0
      %s144 = sadd.s32 %s143, 1
      %s145 = scalar_select %p142, %s143, %s144
      %p148 = pneg %p142
      %p149 = scmp.eq.s32.totalorder %s23, 3
      %p150 = por %p148, %p149
      %p151 = scmp.ne.s32.totalorder %s143, %s146
      %p152 = scmp.eq.s32.totalorder %s23, 0
      %p153 = por %p151, %p152
      %p154 = scmp.ne.s32.totalorder %s143, %s146
      %p155 = scmp.eq.s32.totalorder %s28, 3
      %p156 = por %p154, %p155
      %p157 = scmp.ne.s32.totalorder %s146, %s147
      %p158 = scmp.eq.s32.totalorder %s28, 0
      %p159 = por %p157, %p158
      %p160 = scmp.ne.s32.totalorder %s146, %s147
      %p161 = scmp.eq.s32.totalorder %s29, 3
      %p162 = por %p160, %p161
      %p164 = scmp.ne.s32.totalorder %s147, %s163
      %p165 = scmp.eq.s32.totalorder %s29, 0
      %p166 = por %p164, %p165
      %s167 = ssub.s32 %s30, %s42
      %p168 = scmp.eq.s32.totalorder %s167, 0
      %s170 = sadd.s32 %s169, 1
      %s171 = scalar_select %p168, %s169, %s170
      %p174 = pneg %p168
      %p175 = scmp.eq.s32.totalorder %s23, 3
      %p176 = por %p174, %p175
      %p177 = scmp.ne.s32.totalorder %s169, %s172
      %p178 = scmp.eq.s32.totalorder %s23, 0
      %p179 = por %p177, %p178
      %p180 = scmp.ne.s32.totalorder %s169, %s172
      %p181 = scmp.eq.s32.totalorder %s28, 3
      %p182 = por %p180, %p181
      %p183 = scmp.ne.s32.totalorder %s172, %s173
      %p184 = scmp.eq.s32.totalorder %s28, 0
      %p185 = por %p183, %p184
      %p186 = scmp.ne.s32.totalorder %s172, %s173
      %p187 = scmp.eq.s32.totalorder %s29, 3
      %p188 = por %p186, %p187
      %p190 = scmp.ne.s32.totalorder %s173, %s189
      %p191 = scmp.eq.s32.totalorder %s29, 0
      %p192 = por %p190, %p191
      %p193 = scmp.le.s32.totalorder 1, %s23
      %p194 = scmp.lt.s32.totalorder %s23, 5
      %p195 = pnand %p193, %p194
      %p196 = pneg %p195
      // Predicated region
      $region9: #{tpu_custom_call.1} parent=5 // pred_check
        _
      $region10: #{tpu_custom_call.1} parent=5 // pred_check_branch
        %198 = sbr.rel (%p195) target = $region12
      $region11: #{tpu_custom_call.1} parent=5 // pred_region
        %s199 = ssub.s32 %s23, 1
      $region12: #{tpu_custom_call.1} parent=5 // pred_fallthru
        _
      %p200 = scmp.lt.s32.totalorder %s23, 4
      // Predicated region
      $region13: #{tpu_custom_call.1} parent=5 // pred_check
        %p201 = pneg %p200
      $region14: #{tpu_custom_call.1} parent=5 // pred_check_branch
        %203 = sbr.rel (%p201) target = $region16
      $region15: #{tpu_custom_call.1} parent=5 // pred_region
        // Predicated region
        $region17: #{tpu_custom_call.1} parent=15 // pred_check
          %p204 = pneg %p65
        $region18: #{tpu_custom_call.1} parent=15 // pred_check_branch
          %206 = sbr.rel (%p204) target = $region20
        $region19: #{tpu_custom_call.1} parent=15 // pred_region
          %s207 = sand.u32 %s55, 1
          %s208 = scalar_lea.sflag [#allocation5], %s207
          %s209 = sand.u32 %s55, 1
          %s210 = smul.addr %s209, 16
          %s211 = scalar_lea.vmem [#allocation4], %s210
          %s212 = smul.u32 %s31, 2
          %s213 = ssub.s32 1, %s212
          %s214 = smul.u32 %s30, %s213
          %s215 = sadd.s32 %s31, %s214
          %s216 = smul.u32 8, %s215
          %s218 = ssub.s32 256, 256
          %219 = vsyncadd %s208, %s218
          %s220 = smul.addr %s30, 16
          %s221 = sadd.s32 %s216, %s220
          %s222 = smul.addr %s221, 32
          %s223 = scalar_lea.hbm %s0, %s222
          %s224 = sshll.u32 %s211, 4
          %s225 = int_to_ptr.vmem [resolvable:$true] %s224
          %230 = dma.hbm_to_vmem [thread:$0]  %s223, 256, %s225, %s208, 32, 32, 2
        $region20: #{tpu_custom_call.1} parent=15 // pred_fallthru
          _
        // Predicated region
        $region21: #{tpu_custom_call.1} parent=15 // pred_check
          %p231 = pneg %p91
        $region22: #{tpu_custom_call.1} parent=15 // pred_check_branch
          %233 = sbr.rel (%p231) target = $region24
        $region23: #{tpu_custom_call.1} parent=15 // pred_region
          %s234 = sand.u32 %s81, 1
          %s235 = scalar_lea.sflag [#allocation8], %s234
          %s236 = sand.u32 %s81, 1
          %s237 = smul.addr %s236, 16
          %s238 = scalar_lea.vmem [#allocation7], %s237
          %s240 = ssub.s32 256, 256
          %241 = vsyncadd %s235, %s240
          %s242 = smul.addr %s30, 4
          %s243 = smul.addr %s242, 64
          %s244 = scalar_lea.hbm %s1, %s243
          %s245 = sshll.u32 %s238, 4
          %s246 = int_to_ptr.vmem [resolvable:$true] %s245
          %251 = dma.hbm_to_vmem [thread:$0]  %s244, 256, %s246, %s235, 64, 64, 4
        $region24: #{tpu_custom_call.1} parent=15 // pred_fallthru
          _
      $region16: #{tpu_custom_call.1} parent=5 // pred_fallthru
        _
      %p252 = scmp.le.s32.totalorder 1, %s23
      %p253 = scmp.lt.s32.totalorder %s23, 5
      %p254 = pnand %p252, %p253
      %p255 = pneg %p254
      // Predicated region
      $region25: #{tpu_custom_call.1} parent=5 // pred_check
        _
      $region26: #{tpu_custom_call.1} parent=5 // pred_check_branch
        %257 = sbr.rel (%p254) target = $region28
      $region27: #{tpu_custom_call.1} parent=5 // pred_region
        %s258 = ssub.s32 %s23, 1
        %s259 = sand.u32 %s58, 1
        %s260 = scalar_lea.sflag [#allocation5], %s259
        %s261 = sand.u32 %s58, 1
        %s262 = smul.addr %s261, 16
        %s263 = scalar_lea.vmem [#allocation4], %s262
        // Predicated region
        $region29: #{tpu_custom_call.1} parent=27 // pred_check
          %p264 = pneg %p71
        $region30: #{tpu_custom_call.1} parent=27 // pred_check_branch
          %266 = sbr.rel (%p264) target = $region32
        $region31: #{tpu_custom_call.1} parent=27 // pred_region
          %267 = dma.done %s260, 256
        $region32: #{tpu_custom_call.1} parent=27 // pred_fallthru
          _
        %s268 = sand.u32 %s84, 1
        %s269 = scalar_lea.sflag [#allocation8], %s268
        %s270 = sand.u32 %s84, 1
        %s271 = smul.addr %s270, 16
        %s272 = scalar_lea.vmem [#allocation7], %s271
        // Predicated region
        $region33: #{tpu_custom_call.1} parent=27 // pred_check
          %p273 = pneg %p97
        $region34: #{tpu_custom_call.1} parent=27 // pred_check_branch
          %275 = sbr.rel (%p273) target = $region36
        $region35: #{tpu_custom_call.1} parent=27 // pred_region
          %276 = dma.done %s269, 256
        $region36: #{tpu_custom_call.1} parent=27 // pred_fallthru
          _
        %s277 = sand.u32 %s58, 1
        %s278 = scalar_lea.sflag [#allocation5], %s277
        %s279 = sand.u32 %s58, 1
        %s280 = smul.addr %s279, 16
        %s281 = scalar_lea.vmem [#allocation4], %s280
        %p282 = pneg %p71
        %p283 = pneg %p68
        %s284 = sand.u32 %s84, 1
        %s285 = scalar_lea.sflag [#allocation8], %s284
        %s286 = sand.u32 %s84, 1
        %s287 = smul.addr %s286, 16
        %s288 = scalar_lea.vmem [#allocation7], %s287
        %p289 = pneg %p97
        %p290 = pneg %p94
        %p291 = pneg %p133
        %p292 = pneg %p130
        %s293 = sand.u32 %s120, 1
        %s294 = scalar_lea.sflag [#allocation6], %s293
        %s295 = sand.u32 %s120, 1
        %s296 = smul.addr %s295, 16
        %s297 = scalar_lea.vmem [#allocation9], %s296
        %p298 = pneg %p159
        %p299 = pneg %p156
        %s300 = sand.u32 %s28, 1
        %s301 = scalar_lea.sflag [#allocation11], %s300
        %s302 = sand.u32 %s146, 1
        %s303 = smul.addr %s302, 2
        %s304 = scalar_lea.vmem [#allocation10], %s303
        %p305 = pneg %p185
        %p306 = pneg %p182
        %s307 = sand.u32 %s28, 1
        %s308 = scalar_lea.sflag [#allocation11], %s307
        %s309 = sand.u32 %s172, 1
        %s310 = smul.addr %s309, 2
        %s311 = scalar_lea.vmem [#allocation12], %s310
        %s312 = smul.u32 %s33, 2
        %s313 = ssub.s32 1, %s312
        %s314 = smul.u32 %s32, %s313
        %s315 = sadd.s32 %s33, %s314
        %s316 = smul.u32 8, %s315
        %s317 = smul.u32 %s33, 2
        %s318 = ssub.s32 1, %s317
        %s319 = smul.u32 %s32, %s318
        %s320 = sadd.s32 %s33, %s319
        %s321 = smul.u32 8, %s320
        %p323 = scmp.eq.s32.totalorder %s33, 0
        // Predicated region
        $region37: #{tpu_custom_call.1} parent=27 // pred_check
          %p324 = pneg %p323
        $region38: #{tpu_custom_call.1} parent=27 // pred_check_branch
          %326 = sbr.rel (%p324) target = $region40
        $region39: #{tpu_custom_call.1} parent=27 // pred_region
          %vm327 = vcmask 254976
          %328 = vst.msk [vmem:[#allocation2] sm:$0x3] %vm327, 0.0
          %329 = vst.msk [vmem:[#allocation3] sm:$0x3] %vm327, 0.0
        $region40: #{tpu_custom_call.1} parent=27 // pred_fallthru
          _
        %v330 = vld [vmem:[%s272] sm:$0xf]
        %v331 = vld [vmem:[%s272 + $0x4] sm:$0xf]
        %v332 = vld [vmem:[%s272 + $0x8] sm:$0xf]
        %v333 = vld [vmem:[%s272 + $0xc] sm:$0xf]
        %v334 = vld [vmem:[#allocation2] sm:$0x3]
        %v335 = vld [vmem:[#allocation3] sm:$0x3]
        %s336 = smul.u32 %s32, 7
        %s337 = smul.u32 %s336, 2
        %s338 = scalar_lea.vmem %s263, %s337 [#allocation4]
        %v339 = vld [vmem:[%s338] sm:$0x3]
        %v340 = vpack.c.bf16 %v334, %v334
        %v345 = vunpack.c.l.b16 %v330
        %v346 = vunpack.c.l.b16 %v331
        %v347 = vunpack.c.l.b16 %v332
        %v348 = vunpack.c.l.b16 %v333
        %v349 = vpack.c.b16 %v346, %v345
        %v350 = vpack.c.b16 %v348, %v347
        %vm353 = vcmask 261120
        %v355 = vsel %vm353, %v340, 0
        %357 = vmatprep.subr.bf16.mxu0 0
        %358 = vmatpush1.bf16.msra.mxu0 0
        %359 = vmatprep.subr.bf16.mxu0 0
        %360 = vmatpush1.bf16.msra.mxu0 0
        %361 = vmatprep.subr.bf16.mxu0 0
        %362 = vmatpush1.bf16.msra.mxu0 0
        %363 = vmatprep.subr.bf16.mxu0 0
        %364 = vmatpush1.bf16.msra.mxu0 0
        %365 = vmatprep.subr.bf16.mxu0 0
        %366 = vmatpush1.bf16.msra.mxu0 0
        %367 = vmatprep.subr.bf16.mxu0 0
        %368 = vmatpush1.bf16.msra.mxu0 0
        %369 = vmatprep.subr.bf16.mxu0 0
        %370 = vmatpush1.bf16.msra.mxu0 %v350
        %371 = vmatprep.subr.bf16.mxu0 0
        %372 = vmatpush1.bf16.msra.mxu0 %v349
        %373 = vmatprep.subr.bf16.mxu0 0
        %374 = vmatpush2.bf16.msra.mxu0 0
        %375 = vmatprep.subr.bf16.mxu0 0
        %376 = vmatpush2.bf16.msra.mxu0 0
        %377 = vmatprep.subr.bf16.mxu0 0
        %378 = vmatpush2.bf16.msra.mxu0 0
        %379 = vmatprep.subr.bf16.mxu0 0
        %380 = vmatpush2.bf16.msra.mxu0 0
        %381 = vmatprep.subr.bf16.mxu0 0
        %382 = vmatpush2.bf16.msra.mxu0 0
        %383 = vmatprep.subr.bf16.mxu0 0
        %384 = vmatpush2.bf16.msra.mxu0 0
        %385 = vmatprep.subr.bf16.mxu0 0
        %386 = vmatpush2.bf16.msra.mxu0 0
        %387 = vmatprep.subr.bf16.mxu0 0
        %388 = vmatpush2.bf16.msra.mxu0 0
        %389 = vmatprep.mubr.bf16.mxu0 0
        %390 = vmatmul.mubr.bf16.gmra.mxu0 %v355
        %v391 = vpop.f32.mrf.mxu0
        %v392 = vadd.f32 0.0, %v391
        %v393 = vpop.f32.mrf.mxu0
        %v394 = vpop.f32.mrf.mxu0
        %v395 = vpop.f32.mrf.mxu0
        %396 = vdwg.mxu0
        %v397 = vadd.f32 %v339, %v392
        %v398 = vxor.u32 %v397, 2147483648
        %v399 = vmul.f32 %v398, 1.442695
        %v400 = vpow.pop %v399
        %v401 = vadd.f32 %v400, 1.0
        %v402 = vrcp.pop %v401
        %v403 = vmul.f32 1.0, %v402
        %v404 = vtanh.pop %v397
        %406 = vrot.lane.b32.xlu0 %v335, 32
        %v407 = vpop.permute.xlu0 %406
        %v409 = vmul.f32 %v403, %v407
        %411 = vrot.lane.b32.xlu0 %v404, 64
        %v412 = vpop.permute.xlu0 %411
        %v414 = vmul.f32 %v403, %v412
        %416 = vrot.lane.b32.xlu0 %v414, 32
        %v417 = vpop.permute.xlu0 %416
        %v419 = vadd.f32 %v409, %v417
        %v420 = vtanh.pop %v419
        %422 = vrot.lane.b32.xlu0 %v420, 64
        %v423 = vpop.permute.xlu0 %422
        %v425 = vmul.f32 %v403, %v423
        %427 = vrot.lane.b32.xlu0 %v425, 32
        %v428 = vpop.permute.xlu0 %427
        %s430 = scalar_lea.vmem %s297, %s337 [#allocation9]
        %vm431 = vcmask 254976
        %432 = vst.msk [vmem:[%s430] sm:$0x3] %vm431, %v428
        %s433 = smul.u32 %s32, 5
        %s434 = sadd.s32 %s433, 1
        %s435 = smul.u32 %s434, 2
        %s436 = scalar_lea.vmem %s263, %s435 [#allocation4]
        %v437 = vld [vmem:[%s436] sm:$0x3]
        %v438 = vpack.c.bf16 %v425, %v425
        %440 = vrot.lane.b32.xlu0 %v438, 32
        %v441 = vpop.permute.xlu0 %440
        %v443 = vsel %vm353, %v441, 0
        %445 = vmatprep.subr.bf16.mxu0 0
        %446 = vmatpush1.bf16.msra.mxu0 0
        %447 = vmatprep.subr.bf16.mxu0 0
        %448 = vmatpush1.bf16.msra.mxu0 0
        %449 = vmatprep.subr.bf16.mxu0 0
        %450 = vmatpush1.bf16.msra.mxu0 0
        %451 = vmatprep.subr.bf16.mxu0 0
        %452 = vmatpush1.bf16.msra.mxu0 0
        %453 = vmatprep.subr.bf16.mxu0 0
        %454 = vmatpush1.bf16.msra.mxu0 0
        %455 = vmatprep.subr.bf16.mxu0 0
        %456 = vmatpush1.bf16.msra.mxu0 0
        %457 = vmatprep.subr.bf16.mxu0 0
        %458 = vmatpush1.bf16.msra.mxu0 %v350
        %459 = vmatprep.subr.bf16.mxu0 0
        %460 = vmatpush1.bf16.msra.mxu0 %v349
        %461 = vmatprep.subr.bf16.mxu0 0
        %462 = vmatpush2.bf16.msra.mxu0 0
        %463 = vmatprep.subr.bf16.mxu0 0
        %464 = vmatpush2.bf16.msra.mxu0 0
        %465 = vmatprep.subr.bf16.mxu0 0
        %466 = vmatpush2.bf16.msra.mxu0 0
        %467 = vmatprep.subr.bf16.mxu0 0
        %468 = vmatpush2.bf16.msra.mxu0 0
        %469 = vmatprep.subr.bf16.mxu0 0
        %470 = vmatpush2.bf16.msra.mxu0 0
        %471 = vmatprep.subr.bf16.mxu0 0
        %472 = vmatpush2.bf16.msra.mxu0 0
        %473 = vmatprep.subr.bf16.mxu0 0
        %474 = vmatpush2.bf16.msra.mxu0 0
        %475 = vmatprep.subr.bf16.mxu0 0
        %476 = vmatpush2.bf16.msra.mxu0 0
        %477 = vmatprep.mubr.bf16.mxu0 0
        %478 = vmatmul.mubr.bf16.gmra.mxu0 %v443
        %v479 = vpop.f32.mrf.mxu0
        %v480 = vadd.f32 0.0, %v479
        %v481 = vpop.f32.mrf.mxu0
        %v482 = vpop.f32.mrf.mxu0
        %v483 = vpop.f32.mrf.mxu0
        %484 = vdwg.mxu0
        %v485 = vadd.f32 %v437, %v480
        %v486 = vxor.u32 %v485, 2147483648
        %v487 = vmul.f32 %v486, 1.442695
        %v488 = vpow.pop %v487
        %v489 = vadd.f32 %v488, 1.0
        %v490 = vrcp.pop %v489
        %v491 = vmul.f32 1.0, %v490
        %v492 = vtanh.pop %v485
        %v493 = vmul.f32 %v491, %v419
        %495 = vrot.lane.b32.xlu0 %v492, 64
        %v496 = vpop.permute.xlu0 %495
        %v498 = vmul.f32 %v491, %v496
        %500 = vrot.lane.b32.xlu0 %v498, 32
        %v501 = vpop.permute.xlu0 %500
        %v503 = vadd.f32 %v493, %v501
        %v504 = vtanh.pop %v503
        %506 = vrot.lane.b32.xlu0 %v504, 64
        %v507 = vpop.permute.xlu0 %506
        %v509 = vmul.f32 %v491, %v507
        %511 = vrot.lane.b32.xlu0 %v509, 32
        %v512 = vpop.permute.xlu0 %511
        %s514 = scalar_lea.vmem %s297, %s435 [#allocation9]
        %515 = vst.msk [vmem:[%s514] sm:$0x3] %vm431, %v512
        %s516 = smul.u32 %s32, 3
        %s517 = sadd.s32 %s516, 2
        %s518 = smul.u32 %s517, 2
        %s519 = scalar_lea.vmem %s263, %s518 [#allocation4]
        %v520 = vld [vmem:[%s519] sm:$0x3]
        %v521 = vpack.c.bf16 %v509, %v509
        %523 = vrot.lane.b32.xlu0 %v521, 32
        %v524 = vpop.permute.xlu0 %523
        %v526 = vsel %vm353, %v524, 0
        %528 = vmatprep.subr.bf16.mxu0 0
        %529 = vmatpush1.bf16.msra.mxu0 0
        %530 = vmatprep.subr.bf16.mxu0 0
        %531 = vmatpush1.bf16.msra.mxu0 0
        %532 = vmatprep.subr.bf16.mxu0 0
        %533 = vmatpush1.bf16.msra.mxu0 0
        %534 = vmatprep.subr.bf16.mxu0 0
        %535 = vmatpush1.bf16.msra.mxu0 0
        %536 = vmatprep.subr.bf16.mxu0 0
        %537 = vmatpush1.bf16.msra.mxu0 0
        %538 = vmatprep.subr.bf16.mxu0 0
        %539 = vmatpush1.bf16.msra.mxu0 0
        %540 = vmatprep.subr.bf16.mxu0 0
        %541 = vmatpush1.bf16.msra.mxu0 %v350
        %542 = vmatprep.subr.bf16.mxu0 0
        %543 = vmatpush1.bf16.msra.mxu0 %v349
        %544 = vmatprep.subr.bf16.mxu0 0
        %545 = vmatpush2.bf16.msra.mxu0 0
        %546 = vmatprep.subr.bf16.mxu0 0
        %547 = vmatpush2.bf16.msra.mxu0 0
        %548 = vmatprep.subr.bf16.mxu0 0
        %549 = vmatpush2.bf16.msra.mxu0 0
        %550 = vmatprep.subr.bf16.mxu0 0
        %551 = vmatpush2.bf16.msra.mxu0 0
        %552 = vmatprep.subr.bf16.mxu0 0
        %553 = vmatpush2.bf16.msra.mxu0 0
        %554 = vmatprep.subr.bf16.mxu0 0
        %555 = vmatpush2.bf16.msra.mxu0 0
        %556 = vmatprep.subr.bf16.mxu0 0
        %557 = vmatpush2.bf16.msra.mxu0 0
        %558 = vmatprep.subr.bf16.mxu0 0
        %559 = vmatpush2.bf16.msra.mxu0 0
        %560 = vmatprep.mubr.bf16.mxu0 0
        %561 = vmatmul.mubr.bf16.gmra.mxu0 %v526
        %v562 = vpop.f32.mrf.mxu0
        %v563 = vadd.f32 0.0, %v562
        %v564 = vpop.f32.mrf.mxu0
        %v565 = vpop.f32.mrf.mxu0
        %v566 = vpop.f32.mrf.mxu0
        %567 = vdwg.mxu0
        %v568 = vadd.f32 %v520, %v563
        %v569 = vxor.u32 %v568, 2147483648
        %v570 = vmul.f32 %v569, 1.442695
        %v571 = vpow.pop %v570
        %v572 = vadd.f32 %v571, 1.0
        %v573 = vrcp.pop %v572
        %v574 = vmul.f32 1.0, %v573
        %v575 = vtanh.pop %v568
        %v576 = vmul.f32 %v574, %v503
        %578 = vrot.lane.b32.xlu0 %v575, 64
        %v579 = vpop.permute.xlu0 %578
        %v581 = vmul.f32 %v574, %v579
        %583 = vrot.lane.b32.xlu0 %v581, 32
        %v584 = vpop.permute.xlu0 %583
        %v586 = vadd.f32 %v576, %v584
        %v587 = vtanh.pop %v586
        %589 = vrot.lane.b32.xlu0 %v587, 64
        %v590 = vpop.permute.xlu0 %589
        %v592 = vmul.f32 %v574, %v590
        %594 = vrot.lane.b32.xlu0 %v592, 32
        %v595 = vpop.permute.xlu0 %594
        %s597 = scalar_lea.vmem %s297, %s518 [#allocation9]
        %598 = vst.msk [vmem:[%s597] sm:$0x3] %vm431, %v595
        %s599 = sadd.s32 %s32, 3
        %s600 = smul.u32 %s599, 2
        %s601 = scalar_lea.vmem %s263, %s600 [#allocation4]
        %v602 = vld [vmem:[%s601] sm:$0x3]
        %v603 = vpack.c.bf16 %v592, %v592
        %605 = vrot.lane.b32.xlu0 %v603, 32
        %v606 = vpop.permute.xlu0 %605
        %v608 = vsel %vm353, %v606, 0
        %610 = vmatprep.subr.bf16.mxu0 0
        %611 = vmatpush1.bf16.msra.mxu0 0
        %612 = vmatprep.subr.bf16.mxu0 0
        %613 = vmatpush1.bf16.msra.mxu0 0
        %614 = vmatprep.subr.bf16.mxu0 0
        %615 = vmatpush1.bf16.msra.mxu0 0
        %616 = vmatprep.subr.bf16.mxu0 0
        %617 = vmatpush1.bf16.msra.mxu0 0
        %618 = vmatprep.subr.bf16.mxu0 0
        %619 = vmatpush1.bf16.msra.mxu0 0
        %620 = vmatprep.subr.bf16.mxu0 0
        %621 = vmatpush1.bf16.msra.mxu0 0
        %622 = vmatprep.subr.bf16.mxu0 0
        %623 = vmatpush1.bf16.msra.mxu0 %v350
        %624 = vmatprep.subr.bf16.mxu0 0
        %625 = vmatpush1.bf16.msra.mxu0 %v349
        %626 = vmatprep.subr.bf16.mxu0 0
        %627 = vmatpush2.bf16.msra.mxu0 0
        %628 = vmatprep.subr.bf16.mxu0 0
        %629 = vmatpush2.bf16.msra.mxu0 0
        %630 = vmatprep.subr.bf16.mxu0 0
        %631 = vmatpush2.bf16.msra.mxu0 0
        %632 = vmatprep.subr.bf16.mxu0 0
        %633 = vmatpush2.bf16.msra.mxu0 0
        %634 = vmatprep.subr.bf16.mxu0 0
        %635 = vmatpush2.bf16.msra.mxu0 0
        %636 = vmatprep.subr.bf16.mxu0 0
        %637 = vmatpush2.bf16.msra.mxu0 0
        %638 = vmatprep.subr.bf16.mxu0 0
        %639 = vmatpush2.bf16.msra.mxu0 0
        %640 = vmatprep.subr.bf16.mxu0 0
        %641 = vmatpush2.bf16.msra.mxu0 0
        %642 = vmatprep.mubr.bf16.mxu0 0
        %643 = vmatmul.mubr.bf16.gmra.mxu0 %v608
        %v644 = vpop.f32.mrf.mxu0
        %v645 = vadd.f32 0.0, %v644
        %v646 = vpop.f32.mrf.mxu0
        %v647 = vpop.f32.mrf.mxu0
        %v648 = vpop.f32.mrf.mxu0
        %649 = vdwg.mxu0
        %v650 = vadd.f32 %v602, %v645
        %v651 = vxor.u32 %v650, 2147483648
        %v652 = vmul.f32 %v651, 1.442695
        %v653 = vpow.pop %v652
        %v654 = vadd.f32 %v653, 1.0
        %v655 = vrcp.pop %v654
        %v656 = vmul.f32 1.0, %v655
        %v657 = vtanh.pop %v650
        %v658 = vmul.f32 %v656, %v586
        %660 = vrot.lane.b32.xlu0 %v657, 64
        %v661 = vpop.permute.xlu0 %660
        %v663 = vmul.f32 %v656, %v661
        %665 = vrot.lane.b32.xlu0 %v663, 32
        %v666 = vpop.permute.xlu0 %665
        %v668 = vadd.f32 %v658, %v666
        %v669 = vtanh.pop %v668
        %671 = vrot.lane.b32.xlu0 %v669, 64
        %v672 = vpop.permute.xlu0 %671
        %v674 = vmul.f32 %v656, %v672
        %676 = vrot.lane.b32.xlu0 %v674, 32
        %v677 = vpop.permute.xlu0 %676
        %s679 = scalar_lea.vmem %s297, %s600 [#allocation9]
        %680 = vst.msk [vmem:[%s679] sm:$0x3] %vm431, %v677
        %s681 = ssub.s32 4, %s32
        %s682 = smul.u32 %s681, 2
        %s683 = scalar_lea.vmem %s263, %s682 [#allocation4]
        %v684 = vld [vmem:[%s683] sm:$0x3]
        %v685 = vpack.c.bf16 %v674, %v674
        %687 = vrot.lane.b32.xlu0 %v685, 32
        %v688 = vpop.permute.xlu0 %687
        %v690 = vsel %vm353, %v688, 0
        %692 = vmatprep.subr.bf16.mxu0 0
        %693 = vmatpush1.bf16.msra.mxu0 0
        %694 = vmatprep.subr.bf16.mxu0 0
        %695 = vmatpush1.bf16.msra.mxu0 0
        %696 = vmatprep.subr.bf16.mxu0 0
        %697 = vmatpush1.bf16.msra.mxu0 0
        %698 = vmatprep.subr.bf16.mxu0 0
        %699 = vmatpush1.bf16.msra.mxu0 0
        %700 = vmatprep.subr.bf16.mxu0 0
        %701 = vmatpush1.bf16.msra.mxu0 0
        %702 = vmatprep.subr.bf16.mxu0 0
        %703 = vmatpush1.bf16.msra.mxu0 0
        %704 = vmatprep.subr.bf16.mxu0 0
        %705 = vmatpush1.bf16.msra.mxu0 %v350
        %706 = vmatprep.subr.bf16.mxu0 0
        %707 = vmatpush1.bf16.msra.mxu0 %v349
        %708 = vmatprep.subr.bf16.mxu0 0
        %709 = vmatpush2.bf16.msra.mxu0 0
        %710 = vmatprep.subr.bf16.mxu0 0
        %711 = vmatpush2.bf16.msra.mxu0 0
        %712 = vmatprep.subr.bf16.mxu0 0
        %713 = vmatpush2.bf16.msra.mxu0 0
        %714 = vmatprep.subr.bf16.mxu0 0
        %715 = vmatpush2.bf16.msra.mxu0 0
        %716 = vmatprep.subr.bf16.mxu0 0
        %717 = vmatpush2.bf16.msra.mxu0 0
        %718 = vmatprep.subr.bf16.mxu0 0
        %719 = vmatpush2.bf16.msra.mxu0 0
        %720 = vmatprep.subr.bf16.mxu0 0
        %721 = vmatpush2.bf16.msra.mxu0 0
        %722 = vmatprep.subr.bf16.mxu0 0
        %723 = vmatpush2.bf16.msra.mxu0 0
        %724 = vmatprep.mubr.bf16.mxu0 0
        %725 = vmatmul.mubr.bf16.gmra.mxu0 %v690
        %v726 = vpop.f32.mrf.mxu0
        %v727 = vadd.f32 0.0, %v726
        %v728 = vpop.f32.mrf.mxu0
        %v729 = vpop.f32.mrf.mxu0
        %v730 = vpop.f32.mrf.mxu0
        %731 = vdwg.mxu0
        %v732 = vadd.f32 %v684, %v727
        %v733 = vxor.u32 %v732, 2147483648
        %v734 = vmul.f32 %v733, 1.442695
        %v735 = vpow.pop %v734
        %v736 = vadd.f32 %v735, 1.0
        %v737 = vrcp.pop %v736
        %v738 = vmul.f32 1.0, %v737
        %v739 = vtanh.pop %v732
        %v740 = vmul.f32 %v738, %v668
        %742 = vrot.lane.b32.xlu0 %v739, 64
        %v743 = vpop.permute.xlu0 %742
        %v745 = vmul.f32 %v738, %v743
        %747 = vrot.lane.b32.xlu0 %v745, 32
        %v748 = vpop.permute.xlu0 %747
        %v750 = vadd.f32 %v740, %v748
        %v751 = vtanh.pop %v750
        %753 = vrot.lane.b32.xlu0 %v751, 64
        %v754 = vpop.permute.xlu0 %753
        %v756 = vmul.f32 %v738, %v754
        %758 = vrot.lane.b32.xlu0 %v756, 32
        %v759 = vpop.permute.xlu0 %758
        %s761 = scalar_lea.vmem %s297, %s682 [#allocation9]
        %762 = vst.msk [vmem:[%s761] sm:$0x3] %vm431, %v759
        %s763 = smul.u32 %s32, 4294967293
        %s764 = sadd.s32 %s763, 5
        %s765 = smul.u32 %s764, 2
        %s766 = scalar_lea.vmem %s263, %s765 [#allocation4]
        %v767 = vld [vmem:[%s766] sm:$0x3]
        %v768 = vpack.c.bf16 %v756, %v756
        %770 = vrot.lane.b32.xlu0 %v768, 32
        %v771 = vpop.permute.xlu0 %770
        %v773 = vsel %vm353, %v771, 0
        %775 = vmatprep.subr.bf16.mxu0 0
        %776 = vmatpush1.bf16.msra.mxu0 0
        %777 = vmatprep.subr.bf16.mxu0 0
        %778 = vmatpush1.bf16.msra.mxu0 0
        %779 = vmatprep.subr.bf16.mxu0 0
        %780 = vmatpush1.bf16.msra.mxu0 0
        %781 = vmatprep.subr.bf16.mxu0 0
        %782 = vmatpush1.bf16.msra.mxu0 0
        %783 = vmatprep.subr.bf16.mxu0 0
        %784 = vmatpush1.bf16.msra.mxu0 0
        %785 = vmatprep.subr.bf16.mxu0 0
        %786 = vmatpush1.bf16.msra.mxu0 0
        %787 = vmatprep.subr.bf16.mxu0 0
        %788 = vmatpush1.bf16.msra.mxu0 %v350
        %789 = vmatprep.subr.bf16.mxu0 0
        %790 = vmatpush1.bf16.msra.mxu0 %v349
        %791 = vmatprep.subr.bf16.mxu0 0
        %792 = vmatpush2.bf16.msra.mxu0 0
        %793 = vmatprep.subr.bf16.mxu0 0
        %794 = vmatpush2.bf16.msra.mxu0 0
        %795 = vmatprep.subr.bf16.mxu0 0
        %796 = vmatpush2.bf16.msra.mxu0 0
        %797 = vmatprep.subr.bf16.mxu0 0
        %798 = vmatpush2.bf16.msra.mxu0 0
        %799 = vmatprep.subr.bf16.mxu0 0
        %800 = vmatpush2.bf16.msra.mxu0 0
        %801 = vmatprep.subr.bf16.mxu0 0
        %802 = vmatpush2.bf16.msra.mxu0 0
        %803 = vmatprep.subr.bf16.mxu0 0
        %804 = vmatpush2.bf16.msra.mxu0 0
        %805 = vmatprep.subr.bf16.mxu0 0
        %806 = vmatpush2.bf16.msra.mxu0 0
        %807 = vmatprep.mubr.bf16.mxu0 0
        %808 = vmatmul.mubr.bf16.gmra.mxu0 %v773
        %v809 = vpop.f32.mrf.mxu0
        %v810 = vadd.f32 0.0, %v809
        %v811 = vpop.f32.mrf.mxu0
        %v812 = vpop.f32.mrf.mxu0
        %v813 = vpop.f32.mrf.mxu0
        %814 = vdwg.mxu0
        %v815 = vadd.f32 %v767, %v810
        %v816 = vxor.u32 %v815, 2147483648
        %v817 = vmul.f32 %v816, 1.442695
        %v818 = vpow.pop %v817
        %v819 = vadd.f32 %v818, 1.0
        %v820 = vrcp.pop %v819
        %v821 = vmul.f32 1.0, %v820
        %v822 = vtanh.pop %v815
        %v823 = vmul.f32 %v821, %v750
        %825 = vrot.lane.b32.xlu0 %v822, 64
        %v826 = vpop.permute.xlu0 %825
        %v828 = vmul.f32 %v821, %v826
        %830 = vrot.lane.b32.xlu0 %v828, 32
        %v831 = vpop.permute.xlu0 %830
        %v833 = vadd.f32 %v823, %v831
        %v834 = vtanh.pop %v833
        %836 = vrot.lane.b32.xlu0 %v834, 64
        %v837 = vpop.permute.xlu0 %836
        %v839 = vmul.f32 %v821, %v837
        %841 = vrot.lane.b32.xlu0 %v839, 32
        %v842 = vpop.permute.xlu0 %841
        %s844 = scalar_lea.vmem %s297, %s765 [#allocation9]
        %845 = vst.msk [vmem:[%s844] sm:$0x3] %vm431, %v842
        %s846 = smul.u32 %s32, 4294967291
        %s847 = sadd.s32 %s846, 6
        %s848 = smul.u32 %s847, 2
        %s849 = scalar_lea.vmem %s263, %s848 [#allocation4]
        %v850 = vld [vmem:[%s849] sm:$0x3]
        %v851 = vpack.c.bf16 %v839, %v839
        %853 = vrot.lane.b32.xlu0 %v851, 32
        %v854 = vpop.permute.xlu0 %853
        %v856 = vsel %vm353, %v854, 0
        %858 = vmatprep.subr.bf16.mxu0 0
        %859 = vmatpush1.bf16.msra.mxu0 0
        %860 = vmatprep.subr.bf16.mxu0 0
        %861 = vmatpush1.bf16.msra.mxu0 0
        %862 = vmatprep.subr.bf16.mxu0 0
        %863 = vmatpush1.bf16.msra.mxu0 0
        %864 = vmatprep.subr.bf16.mxu0 0
        %865 = vmatpush1.bf16.msra.mxu0 0
        %866 = vmatprep.subr.bf16.mxu0 0
        %867 = vmatpush1.bf16.msra.mxu0 0
        %868 = vmatprep.subr.bf16.mxu0 0
        %869 = vmatpush1.bf16.msra.mxu0 0
        %870 = vmatprep.subr.bf16.mxu0 0
        %871 = vmatpush1.bf16.msra.mxu0 %v350
        %872 = vmatprep.subr.bf16.mxu0 0
        %873 = vmatpush1.bf16.msra.mxu0 %v349
        %874 = vmatprep.subr.bf16.mxu0 0
        %875 = vmatpush2.bf16.msra.mxu0 0
        %876 = vmatprep.subr.bf16.mxu0 0
        %877 = vmatpush2.bf16.msra.mxu0 0
        %878 = vmatprep.subr.bf16.mxu0 0
        %879 = vmatpush2.bf16.msra.mxu0 0
        %880 = vmatprep.subr.bf16.mxu0 0
        %881 = vmatpush2.bf16.msra.mxu0 0
        %882 = vmatprep.subr.bf16.mxu0 0
        %883 = vmatpush2.bf16.msra.mxu0 0
        %884 = vmatprep.subr.bf16.mxu0 0
        %885 = vmatpush2.bf16.msra.mxu0 0
        %886 = vmatprep.subr.bf16.mxu0 0
        %887 = vmatpush2.bf16.msra.mxu0 0
        %888 = vmatprep.subr.bf16.mxu0 0
        %889 = vmatpush2.bf16.msra.mxu0 0
        %890 = vmatprep.mubr.bf16.mxu0 0
        %891 = vmatmul.mubr.bf16.gmra.mxu0 %v856
        %v892 = vpop.f32.mrf.mxu0
        %v893 = vadd.f32 0.0, %v892
        %v894 = vpop.f32.mrf.mxu0
        %v895 = vpop.f32.mrf.mxu0
        %v896 = vpop.f32.mrf.mxu0
        %897 = vdwg.mxu0
        %v898 = vadd.f32 %v850, %v893
        %v899 = vxor.u32 %v898, 2147483648
        %v900 = vmul.f32 %v899, 1.442695
        %v901 = vpow.pop %v900
        %v902 = vadd.f32 %v901, 1.0
        %v903 = vrcp.pop %v902
        %v904 = vmul.f32 1.0, %v903
        %v905 = vtanh.pop %v898
        %v906 = vmul.f32 %v904, %v833
        %908 = vrot.lane.b32.xlu0 %v905, 64
        %v909 = vpop.permute.xlu0 %908
        %v911 = vmul.f32 %v904, %v909
        %913 = vrot.lane.b32.xlu0 %v911, 32
        %v914 = vpop.permute.xlu0 %913
        %v916 = vadd.f32 %v906, %v914
        %v917 = vtanh.pop %v916
        %919 = vrot.lane.b32.xlu0 %v917, 64
        %v920 = vpop.permute.xlu0 %919
        %v922 = vmul.f32 %v904, %v920
        %924 = vrot.lane.b32.xlu0 %v922, 32
        %v925 = vpop.permute.xlu0 %924
        %s927 = scalar_lea.vmem %s297, %s848 [#allocation9]
        %928 = vst.msk [vmem:[%s927] sm:$0x3] %vm431, %v925
        %s929 = smul.u32 %s32, 4294967289
        %s930 = sadd.s32 %s929, 7
        %s931 = smul.u32 %s930, 2
        %s932 = scalar_lea.vmem %s263, %s931 [#allocation4]
        %v933 = vld [vmem:[%s932] sm:$0x3]
        %v934 = vpack.c.bf16 %v922, %v922
        %936 = vrot.lane.b32.xlu0 %v934, 32
        %v937 = vpop.permute.xlu0 %936
        %v939 = vsel %vm353, %v937, 0
        %941 = vmatprep.subr.bf16.mxu0 0
        %942 = vmatpush1.bf16.msra.mxu0 0
        %943 = vmatprep.subr.bf16.mxu0 0
        %944 = vmatpush1.bf16.msra.mxu0 0
        %945 = vmatprep.subr.bf16.mxu0 0
        %946 = vmatpush1.bf16.msra.mxu0 0
        %947 = vmatprep.subr.bf16.mxu0 0
        %948 = vmatpush1.bf16.msra.mxu0 0
        %949 = vmatprep.subr.bf16.mxu0 0
        %950 = vmatpush1.bf16.msra.mxu0 0
        %951 = vmatprep.subr.bf16.mxu0 0
        %952 = vmatpush1.bf16.msra.mxu0 0
        %953 = vmatprep.subr.bf16.mxu0 0
        %954 = vmatpush1.bf16.msra.mxu0 %v350
        %955 = vmatprep.subr.bf16.mxu0 0
        %956 = vmatpush1.bf16.msra.mxu0 %v349
        %957 = vmatprep.subr.bf16.mxu0 0
        %958 = vmatpush2.bf16.msra.mxu0 0
        %959 = vmatprep.subr.bf16.mxu0 0
        %960 = vmatpush2.bf16.msra.mxu0 0
        %961 = vmatprep.subr.bf16.mxu0 0
        %962 = vmatpush2.bf16.msra.mxu0 0
        %963 = vmatprep.subr.bf16.mxu0 0
        %964 = vmatpush2.bf16.msra.mxu0 0
        %965 = vmatprep.subr.bf16.mxu0 0
        %966 = vmatpush2.bf16.msra.mxu0 0
        %967 = vmatprep.subr.bf16.mxu0 0
        %968 = vmatpush2.bf16.msra.mxu0 0
        %969 = vmatprep.subr.bf16.mxu0 0
        %970 = vmatpush2.bf16.msra.mxu0 0
        %971 = vmatprep.subr.bf16.mxu0 0
        %972 = vmatpush2.bf16.msra.mxu0 0
        %973 = vmatprep.mubr.bf16.mxu0 0
        %974 = vmatmul.mubr.bf16.gmra.mxu0 %v939
        %v975 = vpop.f32.mrf.mxu0
        %v976 = vadd.f32 0.0, %v975
        %v977 = vpop.f32.mrf.mxu0
        %v978 = vpop.f32.mrf.mxu0
        %v979 = vpop.f32.mrf.mxu0
        %980 = vdwg.mxu0
        %v981 = vadd.f32 %v933, %v976
        %v982 = vxor.u32 %v981, 2147483648
        %v983 = vmul.f32 %v982, 1.442695
        %v984 = vpow.pop %v983
        %v985 = vadd.f32 %v984, 1.0
        %v986 = vrcp.pop %v985
        %v987 = vmul.f32 1.0, %v986
        %v988 = vtanh.pop %v981
        %v989 = vmul.f32 %v987, %v916
        %991 = vrot.lane.b32.xlu0 %v988, 64
        %v992 = vpop.permute.xlu0 %991
        %v994 = vmul.f32 %v987, %v992
        %996 = vrot.lane.b32.xlu0 %v994, 32
        %v997 = vpop.permute.xlu0 %996
        %v999 = vadd.f32 %v989, %v997
        %v1000 = vtanh.pop %v999
        %1002 = vrot.lane.b32.xlu0 %v1000, 64
        %v1003 = vpop.permute.xlu0 %1002
        %v1005 = vmul.f32 %v987, %v1003
        %1007 = vrot.lane.b32.xlu0 %v1005, 32
        %v1008 = vpop.permute.xlu0 %1007
        %s1010 = scalar_lea.vmem %s297, %s931 [#allocation9]
        %1011 = vst.msk [vmem:[%s1010] sm:$0x3] %vm431, %v1008
        %1012 = vst.msk [vmem:[#allocation2] sm:$0x3] %vm431, %v1008
        %1014 = vrot.lane.b32.xlu0 %v999, 96
        %v1015 = vpop.permute.xlu0 %1014
        %1017 = vst.msk [vmem:[#allocation3] sm:$0x3] %vm431, %v1015
        %p1018 = scmp.eq.s32.totalorder %s33, 1
        // Predicated region
        $region41: #{tpu_custom_call.1} parent=27 // pred_check
          %p1019 = pneg %p1018
        $region42: #{tpu_custom_call.1} parent=27 // pred_check_branch
          %1021 = sbr.rel (%p1019) target = $region44
        $region43: #{tpu_custom_call.1} parent=27 // pred_region
          %1022 = vst.msk [vmem:[%s304] sm:$0x3] %vm431, %v1008
          %1023 = vst.msk [vmem:[%s311] sm:$0x3] %vm431, %v1015
        $region44: #{tpu_custom_call.1} parent=27 // pred_fallthru
          _
        %s1024 = sand.u32 %s120, 1
        %s1025 = scalar_lea.sflag [#allocation6], %s1024
        %s1026 = sand.u32 %s120, 1
        %s1027 = smul.addr %s1026, 16
        %s1028 = scalar_lea.vmem [#allocation9], %s1027
        %s1029 = sand.u32 %s28, 1
        %s1030 = scalar_lea.sflag [#allocation11], %s1029
        %s1031 = sand.u32 %s146, 1
        %s1032 = smul.addr %s1031, 2
        %s1033 = scalar_lea.vmem [#allocation10], %s1032
        %s1034 = sand.u32 %s28, 1
        %s1035 = scalar_lea.sflag [#allocation11], %s1034
        %s1036 = sand.u32 %s172, 1
        %s1037 = smul.addr %s1036, 2
        %s1038 = scalar_lea.vmem [#allocation12], %s1037
        // Predicated region
        $region45: #{tpu_custom_call.1} parent=27 // pred_check
          %p1039 = pneg %p130
        $region46: #{tpu_custom_call.1} parent=27 // pred_check_branch
          %1041 = sbr.rel (%p1039) target = $region48
        $region47: #{tpu_custom_call.1} parent=27 // pred_region
          %s1042 = smul.u32 %s33, 2
          %s1043 = ssub.s32 1, %s1042
          %s1044 = smul.u32 %s32, %s1043
          %s1045 = sadd.s32 %s33, %s1044
          %s1046 = smul.u32 8, %s1045
          %s1048 = ssub.s32 256, 256
          %1049 = vsyncadd %s1025, %s1048
          %s1050 = smul.addr %s32, 16
          %s1051 = sadd.s32 %s1046, %s1050
          %s1052 = smul.addr %s1051, 32
          %s1053 = scalar_lea.hbm %s2, %s1052
          %s1054 = sshll.u32 %s1028, 4
          %s1055 = int_to_ptr.vmem [resolvable:$true] %s1054
          %1060 = dma.vmem_to_hbm [thread:$0]  %s1055, 256, %s1053, %s1025, 32, 32, 2
        $region48: #{tpu_custom_call.1} parent=27 // pred_fallthru
          _
        // Predicated region
        $region49: #{tpu_custom_call.1} parent=27 // pred_check
          %p1061 = pneg %p156
        $region50: #{tpu_custom_call.1} parent=27 // pred_check_branch
          %1063 = sbr.rel (%p1061) target = $region52
        $region51: #{tpu_custom_call.1} parent=27 // pred_region
          %s1065 = ssub.s32 32, 32
          %1066 = vsyncadd %s1030, %s1065
          %s1067 = smul.addr %s32, 32
          %s1068 = scalar_lea.hbm %s3, %s1067
          %s1070 = sshll.u32 %s1033, 4
          %s1071 = int_to_ptr.vmem [resolvable:$true] %s1070
          %1073 = dma.vmem_to_hbm [thread:$0]  %s1071, 32, %s1068, %s1030
        $region52: #{tpu_custom_call.1} parent=27 // pred_fallthru
          _
        // Predicated region
        $region53: #{tpu_custom_call.1} parent=27 // pred_check
          %p1074 = pneg %p182
        $region54: #{tpu_custom_call.1} parent=27 // pred_check_branch
          %1076 = sbr.rel (%p1074) target = $region56
        $region55: #{tpu_custom_call.1} parent=27 // pred_region
          %s1078 = ssub.s32 32, 32
          %1079 = vsyncadd %s1035, %s1078
          %s1080 = smul.addr %s32, 32
          %s1081 = scalar_lea.hbm %s4, %s1080
          %s1083 = sshll.u32 %s1038, 4
          %s1084 = int_to_ptr.vmem [resolvable:$true] %s1083
          %1086 = dma.vmem_to_hbm [thread:$0]  %s1084, 32, %s1081, %s1035
        $region56: #{tpu_custom_call.1} parent=27 // pred_fallthru
          _
      $region28: #{tpu_custom_call.1} parent=5 // pred_fallthru
        _
      %p1087 = scmp.le.s32.totalorder 2, %s23
      // Predicated region
      $region57: #{tpu_custom_call.1} parent=5 // pred_check
        %p1088 = pneg %p1087
      $region58: #{tpu_custom_call.1} parent=5 // pred_check_branch
        %1090 = sbr.rel (%p1088) target = $region60
      $region59: #{tpu_custom_call.1} parent=5 // pred_region
        %s1091 = ssub.s32 %s23, 2
        // Predicated region
        $region61: #{tpu_custom_call.1} parent=59 // pred_check
          %p1092 = pneg %p136
        $region62: #{tpu_custom_call.1} parent=59 // pred_check_branch
          %1094 = sbr.rel (%p1092) target = $region64
        $region63: #{tpu_custom_call.1} parent=59 // pred_region
          %s1095 = sand.u32 %s121, 1
          %s1096 = scalar_lea.sflag [#allocation6], %s1095
          %s1097 = sand.u32 %s121, 1
          %s1098 = smul.addr %s1097, 16
          %s1099 = scalar_lea.vmem [#allocation9], %s1098
          %1100 = dma.done %s1096, 256
        $region64: #{tpu_custom_call.1} parent=59 // pred_fallthru
          _
        // Predicated region
        $region65: #{tpu_custom_call.1} parent=59 // pred_check
          %p1101 = pneg %p162
        $region66: #{tpu_custom_call.1} parent=59 // pred_check_branch
          %1103 = sbr.rel (%p1101) target = $region68
        $region67: #{tpu_custom_call.1} parent=59 // pred_region
          %s1104 = sand.u32 %s29, 1
          %s1105 = scalar_lea.sflag [#allocation11], %s1104
          %s1106 = sand.u32 %s147, 1
          %s1107 = smul.addr %s1106, 2
          %s1108 = scalar_lea.vmem [#allocation10], %s1107
          %1109 = dma.done %s1105, 32
        $region68: #{tpu_custom_call.1} parent=59 // pred_fallthru
          _
        // Predicated region
        $region69: #{tpu_custom_call.1} parent=59 // pred_check
          %p1110 = pneg %p188
        $region70: #{tpu_custom_call.1} parent=59 // pred_check_branch
          %1112 = sbr.rel (%p1110) target = $region72
        $region71: #{tpu_custom_call.1} parent=59 // pred_region
          %s1113 = sand.u32 %s29, 1
          %s1114 = scalar_lea.sflag [#allocation11], %s1113
          %s1115 = sand.u32 %s173, 1
          %s1116 = smul.addr %s1115, 2
          %s1117 = scalar_lea.vmem [#allocation12], %s1116
          %1118 = dma.done %s1114, 32
        $region72: #{tpu_custom_call.1} parent=59 // pred_fallthru
          _
      $region60: #{tpu_custom_call.1} parent=5 // pred_fallthru
        _
    $region6: #{tpu_custom_call.1} parent=1 // loop_footer
      %s27 = sadd.s32 1, %s23
    $region7: #{tpu_custom_call.1} parent=1 // loop_footer_branch
      %22 = sbr.rel target = $region3
    $region8: #{tpu_custom_call.1} parent=1 // loop_exit
      _
    %1119 = vsyncpa [#allocation5], 1
    %s1120 = scalar_lea.sflag [#allocation5], 1
    %1121 = vsyncpa %s1120, 1
    %1122 = vsyncpa [#allocation8], 1
    %s1123 = scalar_lea.sflag [#allocation8], 1
    %1124 = vsyncpa %s1123, 1
    %1125 = vsyncpa [#allocation6], 1
    %s1126 = scalar_lea.sflag [#allocation6], 1
    %1127 = vsyncpa %s1126, 1
    %1128 = vsyncpa [#allocation11], 1
    %s1129 = scalar_lea.sflag [#allocation11], 1
    %1130 = vsyncpa %s1129, 1

</llo_original>
